<compile_context>
chip_gen: v7x
topology: tpu7x:2x2x1
jax: 0.10.0
libtpu: 0.0.40
codegen_flags: <defaults>
</compile_context>

<pallas_src>
import functools
import math

import jax
import jax.numpy as jnp
from jax.experimental import pallas as pl
from jax.experimental.pallas import tpu as pltpu

D_MODEL = 1024
N_HEADS = 4
HEAD_DIM = D_MODEL // N_HEADS
FF_DIM = 2048
Q_IN = 768
Q_HID = 512
CLS_HID = 128
CLS_OUT_PAD = 128          # lane-dense padded width for the final Linear(128, 1)
LN_EPS = 1e-5

VMEM_LIMIT_BYTES = 48 * 1024 * 1024   # explicit scoped-VMEM cap, safe on v5e/v6e/v7x


def _cparams(dims=None):
    return pltpu.CompilerParams(dimension_semantics=dims,
                                vmem_limit_bytes=VMEM_LIMIT_BYTES)


def _layernorm(y, g, b):
    # y: [rows, E] f32; g/b: [1, E] f32
    mean = jnp.mean(y, axis=-1, keepdims=True)
    var = jnp.mean(jnp.square(y - mean), axis=-1, keepdims=True)
    return (y - mean) * jax.lax.rsqrt(var + LN_EPS) * g + b


# ----------------------- fused 2-layer MLP (q_to_embed / classifier) --------

def _mlp2_kernel(x_ref, w1_ref, b1_ref, w2_ref, b2_ref, o_ref):
    # y = relu(x @ W1 + b1) @ W2 + b2 ; weights bf16, accumulate f32.
    x = x_ref[...].astype(jnp.bfloat16)
    h = jnp.dot(x, w1_ref[...], preferred_element_type=jnp.float32) + b1_ref[...]
    h = jnp.maximum(h, 0.0)
    y = jnp.dot(h.astype(jnp.bfloat16), w2_ref[...],
                preferred_element_type=jnp.float32) + b2_ref[...]
    o_ref[...] = y.astype(o_ref.dtype)


def mlp2(x, w1, b1, w2, b2):
    """Fused Linear -> ReLU -> Linear.  x:[M,K] f32, w bf16, b f32."""
    M = x.shape[0]
    N = w2.shape[1]
    return pl.pallas_call(
        _mlp2_kernel,
        out_shape=jax.ShapeDtypeStruct((M, N), jnp.float32),
        compiler_params=_cparams(),
    )(x, w1, b1.reshape(1, -1), w2, b2.reshape(1, -1))


# ----------------------- attention sub-layer (fused) ------------------------
# Per grid step (one transformer-"batch" element n of N = S+1):
#   qkv = x_n @ Win + bin ; per-head softmax attention over L = B rows ;
#   out-proj folded in per head ; residual ; LayerNorm1.

def _attn_sublayer_kernel(x_ref, win_ref, bin_ref, wout_ref, bout_ref,
                          g_ref, b_ref, o_ref, *, n_heads, scale):
    x = x_ref[0]                                    # [L, E] f32
    L, E = x.shape
    Dh = E // n_heads

    qkv = jnp.dot(x.astype(jnp.bfloat16), win_ref[...],
                  preferred_element_type=jnp.float32) + bin_ref[...]   # [L, 3E] f32

    attn = jnp.zeros_like(x)
    for h in range(n_heads):
        q_h = qkv[:, h * Dh:(h + 1) * Dh] * scale
        k_h = qkv[:, E + h * Dh:E + (h + 1) * Dh]
        v_h = qkv[:, 2 * E + h * Dh:2 * E + (h + 1) * Dh]

        # scores = q_h @ k_h^T (contract last dims; no explicit transpose)
        s = jax.lax.dot_general(
            q_h.astype(jnp.bfloat16), k_h.astype(jnp.bfloat16),
            dimension_numbers=(((1,), (1,)), ((), ())),
            preferred_element_type=jnp.float32)                        # [L, L]
        s = s - jnp.max(s, axis=-1, keepdims=True)
        p = jnp.exp(s)
        p = p * pl.reciprocal(jnp.sum(p, axis=-1, keepdims=True), approx=True)

        o_h = jnp.dot(p.astype(jnp.bfloat16), v_h.astype(jnp.bfloat16),
                      preferred_element_type=jnp.float32)              # [L, Dh]
        # concat(heads) @ Wout  ==  sum_h  o_h @ Wout[h*Dh:(h+1)*Dh, :]
        attn = attn + jnp.dot(o_h.astype(jnp.bfloat16),
                              wout_ref[h * Dh:(h + 1) * Dh, :],
                              preferred_element_type=jnp.float32)
    attn = attn + bout_ref[...]

    y = x + attn                                    # residual (post-LN encoder)
    o_ref[0] = _layernorm(y, g_ref[...], b_ref[...]).astype(o_ref.dtype)


def attention_sublayer(x_nle, p):
    N, L, E = x_nle.shape
    scale = 1.0 / math.sqrt(E // N_HEADS)
    blk = pl.BlockSpec((1, L, E), lambda n: (n, 0, 0))
    full = lambda shape: pl.BlockSpec(shape, lambda n: (0, 0))   # resident weights
    return pl.pallas_call(
        functools.partial(_attn_sublayer_kernel, n_heads=N_HEADS, scale=scale),
        out_shape=jax.ShapeDtypeStruct((N, L, E), jnp.float32),
        grid=(N,),
        in_specs=[
            blk,                      # x
            full((E, 3 * E)),         # in_proj_w   (bf16)
            full((1, 3 * E)),         # in_proj_b
            full((E, E)),             # out_proj_w  (bf16)
            full((1, E)),             # out_proj_b
            full((1, E)),             # ln1 gamma
            full((1, E)),             # ln1 beta
        ],
        out_specs=blk,
        compiler_params=_cparams(("parallel",)),
    )(x_nle, p["in_proj_w"], p["in_proj_b"].reshape(1, -1),
      p["out_proj_w"], p["out_proj_b"].reshape(1, -1),
      p["ln1_g"].reshape(1, -1), p["ln1_b"].reshape(1, -1))


# ----------------------- feed-forward sub-layer (fused) ---------------------
# Grid (M tiles, FF chunks): acc += relu(h @ W1[:,chunk] + b1[chunk]) @ W2[chunk,:]
# Finalize: + b2 + residual(h), LayerNorm2.  [M, FF] never hits HBM.

def _ffn_sublayer_kernel(h_ref, w1_ref, b1_ref, w2_ref, b2_ref, g_ref, bln_ref,
                         o_ref, acc_ref):
    j = pl.program_id(1)

    @pl.when(j == 0)
    def _():
        acc_ref[...] = jnp.zeros_like(acc_ref)

    h_bf = h_ref[...].astype(jnp.bfloat16)
    t = jnp.dot(h_bf, w1_ref[...], preferred_element_type=jnp.float32) + b1_ref[...]
    t = jnp.maximum(t, 0.0)
    acc_ref[...] += jnp.dot(t.astype(jnp.bfloat16), w2_ref[...],
                            preferred_element_type=jnp.float32)

    @pl.when(j == pl.num_programs(1) - 1)
    def _():
        y = h_ref[...] + acc_ref[...] + b2_ref[...]          # residual + ff2 bias
        o_ref[...] = _layernorm(y, g_ref[...], bln_ref[...]).astype(o_ref.dtype)


def _pick_tile(n, candidates):
    for c in candidates:
        if c <= n and n % c == 0:
            return c
    return n


def ffn_sublayer(h, p):
    M, E = h.shape
    FF = p["ff1_w"].shape[1]
    tm = _pick_tile(M, (512, 256, 128))      # M-tile (v7x VMEM / megacore friendly)
    tf = _pick_tile(FF, (1024, 512, 256))    # big FF chunks keep weight DMA saturated
    return pl.pallas_call(
        _ffn_sublayer_kernel,
        out_shape=jax.ShapeDtypeStruct((M, E), jnp.float32),
        grid=(M // tm, FF // tf),
        in_specs=[
            pl.BlockSpec((tm, E), lambda i, j: (i, 0)),   # h (resident across j)
            pl.BlockSpec((E, tf), lambda i, j: (0, j)),   # ff1_w chunk (bf16)
            pl.BlockSpec((1, tf), lambda i, j: (0, j)),   # ff1_b chunk
            pl.BlockSpec((tf, E), lambda i, j: (j, 0)),   # ff2_w chunk (bf16)
            pl.BlockSpec((1, E), lambda i, j: (0, 0)),    # ff2_b
            pl.BlockSpec((1, E), lambda i, j: (0, 0)),    # ln2 gamma
            pl.BlockSpec((1, E), lambda i, j: (0, 0)),    # ln2 beta
        ],
        out_specs=pl.BlockSpec((tm, E), lambda i, j: (i, 0)),
        scratch_shapes=[pltpu.VMEM((tm, E), jnp.float32)],
        compiler_params=_cparams(("parallel", "arbitrary")),
    )(h, p["ff1_w"], p["ff1_b"].reshape(1, -1), p["ff2_w"],
      p["ff2_b"].reshape(1, -1), p["ln2_g"].reshape(1, -1),
      p["ln2_b"].reshape(1, -1))


# ------------------------------ model glue -----------------------------------

def positional_encoding(max_len, d_model):
    position = jnp.arange(max_len, dtype=jnp.float32)[:, None]
    div_term = jnp.exp(jnp.arange(0, d_model, 2, dtype=jnp.float32)
                       * (-math.log(10000.0) / d_model))
    pe = jnp.zeros((max_len, 1, d_model), dtype=jnp.float32)
    pe = pe.at[:, 0, 0::2].set(jnp.sin(position * div_term))
    pe = pe.at[:, 0, 1::2].set(jnp.cos(position * div_term))
    return pe


def encoder_layer(x_nle, p):
    # x_nle: [N, L, E] (N = transformer batch = S+1, L = transformer seq = B)
    N, L, E = x_nle.shape
    h_nle = attention_sublayer(x_nle, p)              # QKV + MHA + out-proj + add&LN1
    out = ffn_sublayer(h_nle.reshape(N * L, E), p)    # FF1+ReLU+FF2 + add&LN2
    return out.reshape(N, L, E)


def classification_head_forward(params, generator_enc_features, question_enc_features):
    B, S, E = generator_enc_features.shape
    assert E == D_MODEL

    # q_to_embed: Linear(768,512) -> ReLU -> Linear(512,1024), one fused kernel.
    q_emb = mlp2(question_enc_features,
                 params["q1_w"], params["q1_b"],
                 params["q2_w"], params["q2_b"])[:, None, :]            # [B, 1, 1024]

    feats = jnp.concatenate([generator_enc_features, q_emb], axis=1)    # [B, S+1, E]

    # PositionalEncoding(1024): x + pe[:x.size(0)] (dropout = identity in eval).
    feats = feats + positional_encoding(B, D_MODEL)

    # One re-layout to [N, L, E] (transformer batch-major); replaces all per-layer
    # q/k/v transposes — every kernel then sees contiguous per-batch rows.
    x = jnp.transpose(feats, (1, 0, 2))                                 # [S+1, B, E]

    for lp in params["layers"]:
        x = encoder_layer(x, lp)

    pooled = x[0]                                   # == transformer_out[:, 0] -> [B, E]

    # classification: Linear(1024,128) -> ReLU -> Linear(128,1), one fused kernel.
    # Final weight zero-padded to 128 output lanes for a lane-dense store.
    w2, b2 = params["c2_w"], params["c2_b"]
    w2p = jnp.zeros((CLS_HID, CLS_OUT_PAD), w2.dtype).at[:, :w2.shape[1]].set(w2)
    b2p = jnp.zeros((CLS_OUT_PAD,), jnp.float32).at[:b2.shape[0]].set(b2)
    out = mlp2(pooled, params["c1_w"], params["c1_b"], w2p, b2p)        # [B, 128]
    return out[:, :1]                                                   # [B, 1]


def init_params(key):
    # Deterministic synthetic init; weights stored as [in, out] (y = x @ W + b).
    # Matmul weights in bf16 (f32 accumulation in-kernel), biases / LN params f32.
    def dense(k, fan_in, fan_out):
        k1, k2 = jax.random.split(k)
        w = (jax.random.normal(k1, (fan_in, fan_out), jnp.float32) * 0.02
             ).astype(jnp.bfloat16)
        b = jax.random.normal(k2, (fan_out,), jnp.float32) * 0.02
        return w, b

    keys = jax.random.split(key, 8)
    params = {}
    params["q1_w"], params["q1_b"] = dense(keys[0], Q_IN, Q_HID)
    params["q2_w"], params["q2_b"] = dense(keys[1], Q_HID, D_MODEL)
    layers = []
    for i in range(2):
        lk = jax.random.split(keys[2 + i], 4)
        lp = {}
        lp["in_proj_w"], lp["in_proj_b"] = dense(lk[0], D_MODEL, 3 * D_MODEL)
        lp["out_proj_w"], lp["out_proj_b"] = dense(lk[1], D_MODEL, D_MODEL)
        lp["ff1_w"], lp["ff1_b"] = dense(lk[2], D_MODEL, FF_DIM)
        lp["ff2_w"], lp["ff2_b"] = dense(lk[3], FF_DIM, D_MODEL)
        lp["ln1_g"] = jnp.ones((D_MODEL,), jnp.float32)
        lp["ln1_b"] = jnp.zeros((D_MODEL,), jnp.float32)
        lp["ln2_g"] = jnp.ones((D_MODEL,), jnp.float32)
        lp["ln2_b"] = jnp.zeros((D_MODEL,), jnp.float32)
        layers.append(lp)
    params["layers"] = layers
    params["c1_w"], params["c1_b"] = dense(keys[4], D_MODEL, CLS_HID)
    params["c2_w"], params["c2_b"] = dense(keys[5], CLS_HID, 1)
    return params


if __name__ == "__main__":
    key = jax.random.PRNGKey(0)
    kp, kg, kq = jax.random.split(key, 3)
    params = init_params(kp)

    B, S = 2, 3
    generator_enc_features = jax.random.normal(kg, (B, S, D_MODEL), jnp.float32)
    question_enc_features = jax.random.normal(kq, (B, Q_IN), jnp.float32)

    out = classification_head_forward(params, generator_enc_features,
                                      question_enc_features)
    out = jax.block_until_ready(out)
    assert out.shape == (B, 1) and out.dtype == jnp.float32
    print("KERNEL_OK")
</pallas_src>

<mosaic_0001>
module attributes {stable_mosaic.version = 11 : i64} {
  func.func @_mlp2_kernel(%arg0: memref<2x768xf32, #tpu.memory_space<vmem>>, %arg1: memref<768x512xbf16, #tpu.memory_space<vmem>>, %arg2: memref<1x512xf32, #tpu.memory_space<vmem>>, %arg3: memref<512x1024xbf16, #tpu.memory_space<vmem>>, %arg4: memref<1x1024xf32, #tpu.memory_space<vmem>>, %arg5: memref<2x1024xf32, #tpu.memory_space<vmem>>) attributes {dimension_semantics = [], scalar_prefetch = 0 : i64, scratch_operands = 0 : i64, tpu.core_type = #tpu.core_type<tc>} {
    %c0 = arith.constant 0 : index
    %c0_0 = arith.constant 0 : index
    %0 = vector.load %arg0[%c0, %c0_0] : memref<2x768xf32, #tpu.memory_space<vmem>>, vector<2x768xf32>
    %1 = arith.truncf %0 : vector<2x768xf32> to vector<2x768xbf16>
    %c0_1 = arith.constant 0 : index
    %c0_2 = arith.constant 0 : index
    %2 = vector.load %arg1[%c0_1, %c0_2] : memref<768x512xbf16, #tpu.memory_space<vmem>>, vector<768x512xbf16>
    %cst = arith.constant dense<0.000000e+00> : vector<2x512xf32>
    %3 = tpu.matmul %1, %2, %cst {dimension_numbers = #tpu.dot_dimension_numbers<[1], [0], [0], [1], [0, 0, 1, 1], [], []>} : vector<2x768xbf16>, vector<768x512xbf16>, vector<2x512xf32> -> vector<2x512xf32>
    %c0_3 = arith.constant 0 : index
    %c0_4 = arith.constant 0 : index
    %4 = vector.load %arg2[%c0_3, %c0_4] : memref<1x512xf32, #tpu.memory_space<vmem>>, vector<1x512xf32>
    %5 = vector.broadcast %4 : vector<1x512xf32> to vector<2x512xf32>
    %6 = arith.addf %3, %5 : vector<2x512xf32>
    %cst_5 = arith.constant 0.000000e+00 : f32
    %7 = vector.broadcast %cst_5 : f32 to vector<2x512xf32>
    %8 = arith.maximumf %6, %7 : vector<2x512xf32>
    %9 = arith.truncf %8 : vector<2x512xf32> to vector<2x512xbf16>
    %c0_6 = arith.constant 0 : index
    %c0_7 = arith.constant 0 : index
    %10 = vector.load %arg3[%c0_6, %c0_7] : memref<512x1024xbf16, #tpu.memory_space<vmem>>, vector<512x1024xbf16>
    %cst_8 = arith.constant dense<0.000000e+00> : vector<2x1024xf32>
    %11 = tpu.matmul %9, %10, %cst_8 {dimension_numbers = #tpu.dot_dimension_numbers<[1], [0], [0], [1], [0, 0, 1, 1], [], []>} : vector<2x512xbf16>, vector<512x1024xbf16>, vector<2x1024xf32> -> vector<2x1024xf32>
    %c0_9 = arith.constant 0 : index
    %c0_10 = arith.constant 0 : index
    %12 = vector.load %arg4[%c0_9, %c0_10] : memref<1x1024xf32, #tpu.memory_space<vmem>>, vector<1x1024xf32>
    %13 = vector.broadcast %12 : vector<1x1024xf32> to vector<2x1024xf32>
    %14 = arith.addf %11, %13 : vector<2x1024xf32>
    %c0_11 = arith.constant 0 : index
    %c0_12 = arith.constant 0 : index
    %15 = vector.load %arg5[%c0_11, %c0_12] : memref<2x1024xf32, #tpu.memory_space<vmem>>, vector<2x1024xf32>
    tpu.vector_store %arg5[%c0_11, %c0_12], %14 {strides = array<i32>} : memref<2x1024xf32, #tpu.memory_space<vmem>>, vector<2x1024xf32>,
    return
  }
}

</mosaic_0001>

<llo_original>
// kernel: tpu_custom_call.1
$region0: #{tpu_custom_call.1}
  #allocation0 [shape = 'u32[]', space=smem, size = 0x4, offset = 0x4, fixed_abs, tag = 'smem constant byte address 0x4 - core index']
  #allocation1 [shape = 'u32[144,128]{1,0:T(1,128)}', space=vmem, size = 0x12000, scoped, tag = 'internal scratch']
  %s0 = inlined_call_operand.hbm [shape: f32[2,768], index: 0, kind: input, shape index: {}]
  %s1 = inlined_call_operand.hbm [shape: bf16[768,512], index: 1, kind: input, shape index: {}]
  %s2 = inlined_call_operand.vmem [shape: f32[1,512], index: 2, kind: input, shape index: {}]
  %s3 = inlined_call_operand.hbm [shape: bf16[512,1024], index: 3, kind: input, shape index: {}]
  %s4 = inlined_call_operand.vmem [shape: f32[1,1024], index: 4, kind: input, shape index: {}]
  %s5 = inlined_call_operand.hbm [shape: f32[2,1024], index: 5, kind: output, shape index: {}]
  %s6 = sld [smem:[#allocation0]]
  $region42: #{tpu_custom_call.1} parent=0
    _
  %s8 = ssub.s32 1, %s6
  %s9 = scalar_select 0, %s8, %s6
  $region1: #{tpu_custom_call.1} parent=0
    #allocation2 [shape = 'u8[6144]{0}', space=vmem, size = 0x1800, scoped, tag = 'input window, operand 0, single buffered']
    #allocation3 [shape = 's32[1]{0}', space=sflag, size = 0x4, scoped, tag = 'scoped memory for tpu_custom_call.1']
    #allocation4 [shape = 's32[1]{0}', space=sflag, size = 0x4, scoped, tag = 'scoped memory for tpu_custom_call.1']
    #allocation5 [shape = 'u8[786432]{0}', space=vmem, size = 0xc0000, scoped, tag = 'input window, operand 1, single buffered']
    #allocation6 [shape = 's32[1]{0}', space=sflag, size = 0x4, scoped, tag = 'scoped memory for tpu_custom_call.1']
    #allocation7 [shape = 'u8[1048576]{0}', space=vmem, size = 0x100000, scoped, tag = 'input window, operand 3, single buffered']
    #allocation8 [shape = 'u8[8192]{0}', space=vmem, size = 0x2000, scoped, tag = 'output window, operand 0, single buffered']
    %10 = vsyncpa [#allocation3], 0
    %11 = vsyncpa [#allocation6], 0
    %12 = vsyncpa [#allocation4], 0
    // Predicated region
    $region2: #{tpu_custom_call.1} parent=1 // pred_check
      _
    $region3: #{tpu_custom_call.1} parent=1 // pred_check_branch
      %14 = sbr.rel (0) target = $region5
    $region4: #{tpu_custom_call.1} parent=1 // pred_region
      %s16 = ssub.s32 192, 192
      %17 = vsyncadd [#allocation3], %s16
      %s19 = sshll.u32 [#allocation2], 4
      %s20 = int_to_ptr.vmem [resolvable:$true] %s19
      %22 = dma.hbm_to_vmem [thread:$0]  %s0, 192, %s20, [#allocation3]
    $region5: #{tpu_custom_call.1} parent=1 // pred_fallthru
      _
    // Predicated region
    $region6: #{tpu_custom_call.1} parent=1 // pred_check
      _
    $region7: #{tpu_custom_call.1} parent=1 // pred_check_branch
      %24 = sbr.rel (0) target = $region9
    $region8: #{tpu_custom_call.1} parent=1 // pred_region
      %s26 = ssub.s32 24576, 24576
      %27 = vsyncadd [#allocation6], %s26
      %s28 = sshll.u32 [#allocation5], 4
      %s29 = int_to_ptr.vmem [resolvable:$true] %s28
      %34 = dma.hbm_to_vmem [thread:$0]  %s1, 24576, %s29, [#allocation6], 256, 256, 16
    $region9: #{tpu_custom_call.1} parent=1 // pred_fallthru
      _
    // Predicated region
    $region10: #{tpu_custom_call.1} parent=1 // pred_check
      _
    $region11: #{tpu_custom_call.1} parent=1 // pred_check_branch
      %36 = sbr.rel (0) target = $region13
    $region12: #{tpu_custom_call.1} parent=1 // pred_region
      _
    $region13: #{tpu_custom_call.1} parent=1 // pred_fallthru
      _
    // Predicated region
    $region14: #{tpu_custom_call.1} parent=1 // pred_check
      _
    $region15: #{tpu_custom_call.1} parent=1 // pred_check_branch
      %38 = sbr.rel (0) target = $region17
    $region16: #{tpu_custom_call.1} parent=1 // pred_region
      %s40 = ssub.s32 32768, 32768
      %41 = vsyncadd [#allocation6], %s40
      %s42 = sshll.u32 [#allocation7], 4
      %s43 = int_to_ptr.vmem [resolvable:$true] %s42
      %48 = dma.hbm_to_vmem [thread:$0]  %s3, 32768, %s43, [#allocation6], 512, 512, 32
    $region17: #{tpu_custom_call.1} parent=1 // pred_fallthru
      _
    // Predicated region
    $region18: #{tpu_custom_call.1} parent=1 // pred_check
      _
    $region19: #{tpu_custom_call.1} parent=1 // pred_check_branch
      %50 = sbr.rel (0) target = $region21
    $region20: #{tpu_custom_call.1} parent=1 // pred_region
      _
    $region21: #{tpu_custom_call.1} parent=1 // pred_fallthru
      _
    // Predicated region
    $region22: #{tpu_custom_call.1} parent=1 // pred_check
      _
    $region23: #{tpu_custom_call.1} parent=1 // pred_check_branch
      %52 = sbr.rel (0) target = $region25
    $region24: #{tpu_custom_call.1} parent=1 // pred_region
      %53 = dma.done [#allocation3], 192
    $region25: #{tpu_custom_call.1} parent=1 // pred_fallthru
      _
    // Predicated region
    $region26: #{tpu_custom_call.1} parent=1 // pred_check
      _
    $region27: #{tpu_custom_call.1} parent=1 // pred_check_branch
      %55 = sbr.rel (0) target = $region29
    $region28: #{tpu_custom_call.1} parent=1 // pred_region
      %56 = dma.done [#allocation6], 24576
    $region29: #{tpu_custom_call.1} parent=1 // pred_fallthru
      _
    // Predicated region
    $region30: #{tpu_custom_call.1} parent=1 // pred_check
      _
    $region31: #{tpu_custom_call.1} parent=1 // pred_check_branch
      %58 = sbr.rel (0) target = $region33
    $region32: #{tpu_custom_call.1} parent=1 // pred_region
      %59 = dma.done [#allocation6], 32768
    $region33: #{tpu_custom_call.1} parent=1 // pred_fallthru
      _
    %v60 = vld [vmem:[#allocation2] sm:$0xff]
    %v61 = vld [vmem:[#allocation2 + $0x8] sm:$0xf]
    %v64 = vcombine.high %v60, %v60
    %v66 = vunpack.c.l.s4 1983009808
    %v67 = vunpack.c.0.s8 %v66
    %v68 = vlaneseq
    %v69 = vshrl.u32 %v68, 7
    %v70 = vsub.s32 %v67, %v69
    %v71 = vrot.slane %v60, %v70
    %v73 = vunpack.c.l.s4 1983009808
    %v74 = vunpack.c.0.s8 %v73
    %v75 = vlaneseq
    %v76 = vshrl.u32 %v75, 7
    %v77 = vsub.s32 %v74, %v76
    %v78 = vrot.slane %v64, %v77
    %v79 = vcombine.high %v71, %v71
    %v80 = vcombine.high %v78, %v78
    %v82 = vunpack.c.l.s4 1983009808
    %v83 = vunpack.c.0.s8 %v82
    %v84 = vlaneseq
    %v85 = vshrl.u32 %v84, 7
    %v86 = vsub.s32 %v83, %v85
    %v87 = vrot.slane %v61, %v86
    %v88 = vcombine.high %v87, %v87
    %v95 = vpack.c.bf16 %v71, %v71
    %v96 = vpack.c.bf16 %v79, %v79
    %v97 = vpack.c.bf16 %v78, %v78
    %v98 = vpack.c.bf16 %v80, %v80
    %v99 = vpack.c.bf16 %v87, %v87
    %v100 = vpack.c.bf16 %v88, %v88
    %v101 = vld [vmem:[#allocation5] sm:$0xff]
    %v102 = vld [vmem:[#allocation5 + $0x8] sm:$0xff]
    %v103 = vld [vmem:[#allocation5 + $0x10] sm:$0xff]
    %v104 = vld [vmem:[#allocation5 + $0x18] sm:$0xff]
    %v105 = vld [vmem:[#allocation5 + $0x20] sm:$0xff]
    %v106 = vld [vmem:[#allocation5 + $0x28] sm:$0xff]
    %v107 = vld [vmem:[#allocation5 + $0x30] sm:$0xff]
    %v108 = vld [vmem:[#allocation5 + $0x38] sm:$0xff]
    %v109 = vld [vmem:[#allocation5 + $0x40] sm:$0xff]
    %v110 = vld [vmem:[#allocation5 + $0x48] sm:$0xff]
    %v111 = vld [vmem:[#allocation5 + $0x50] sm:$0xff]
    %v112 = vld [vmem:[#allocation5 + $0x58] sm:$0xff]
    %v113 = vld [vmem:[#allocation5 + $0x60] sm:$0xff]
    %v114 = vld [vmem:[#allocation5 + $0x68] sm:$0xff]
    %v115 = vld [vmem:[#allocation5 + $0x70] sm:$0xff]
    %v116 = vld [vmem:[#allocation5 + $0x78] sm:$0xff]
    %v117 = vld [vmem:[#allocation5 + $0x80] sm:$0xff]
    %v118 = vld [vmem:[#allocation5 + $0x88] sm:$0xff]
    %v119 = vld [vmem:[#allocation5 + $0x90] sm:$0xff]
    %v120 = vld [vmem:[#allocation5 + $0x98] sm:$0xff]
    %v121 = vld [vmem:[#allocation5 + $0xa0] sm:$0xff]
    %v122 = vld [vmem:[#allocation5 + $0xa8] sm:$0xff]
    %v123 = vld [vmem:[#allocation5 + $0xb0] sm:$0xff]
    %v124 = vld [vmem:[#allocation5 + $0xb8] sm:$0xff]
    %v125 = vld [vmem:[#allocation5 + $0xc0] sm:$0xff]
    %v126 = vld [vmem:[#allocation5 + $0xc8] sm:$0xff]
    %v127 = vld [vmem:[#allocation5 + $0xd0] sm:$0xff]
    %v128 = vld [vmem:[#allocation5 + $0xd8] sm:$0xff]
    %v129 = vld [vmem:[#allocation5 + $0xe0] sm:$0xff]
    %v130 = vld [vmem:[#allocation5 + $0xe8] sm:$0xff]
    %v131 = vld [vmem:[#allocation5 + $0xf0] sm:$0xff]
    %v132 = vld [vmem:[#allocation5 + $0xf8] sm:$0xff]
    %v133 = vld [vmem:[#allocation5 + $0x100] sm:$0xff]
    %v134 = vld [vmem:[#allocation5 + $0x108] sm:$0xff]
    %v135 = vld [vmem:[#allocation5 + $0x110] sm:$0xff]
    %v136 = vld [vmem:[#allocation5 + $0x118] sm:$0xff]
    %v137 = vld [vmem:[#allocation5 + $0x120] sm:$0xff]
    %v138 = vld [vmem:[#allocation5 + $0x128] sm:$0xff]
    %v139 = vld [vmem:[#allocation5 + $0x130] sm:$0xff]
    %v140 = vld [vmem:[#allocation5 + $0x138] sm:$0xff]
    %v141 = vld [vmem:[#allocation5 + $0x140] sm:$0xff]
    %v142 = vld [vmem:[#allocation5 + $0x148] sm:$0xff]
    %v143 = vld [vmem:[#allocation5 + $0x150] sm:$0xff]
    %v144 = vld [vmem:[#allocation5 + $0x158] sm:$0xff]
    %v145 = vld [vmem:[#allocation5 + $0x160] sm:$0xff]
    %v146 = vld [vmem:[#allocation5 + $0x168] sm:$0xff]
    %v147 = vld [vmem:[#allocation5 + $0x170] sm:$0xff]
    %v148 = vld [vmem:[#allocation5 + $0x178] sm:$0xff]
    %v149 = vld [vmem:[#allocation5 + $0x180] sm:$0xff]
    %v150 = vld [vmem:[#allocation5 + $0x188] sm:$0xff]
    %v151 = vld [vmem:[#allocation5 + $0x190] sm:$0xff]
    %v152 = vld [vmem:[#allocation5 + $0x198] sm:$0xff]
    %v153 = vld [vmem:[#allocation5 + $0x1a0] sm:$0xff]
    %v154 = vld [vmem:[#allocation5 + $0x1a8] sm:$0xff]
    %v155 = vld [vmem:[#allocation5 + $0x1b0] sm:$0xff]
    %v156 = vld [vmem:[#allocation5 + $0x1b8] sm:$0xff]
    %v157 = vld [vmem:[#allocation5 + $0x1c0] sm:$0xff]
    %v158 = vld [vmem:[#allocation5 + $0x1c8] sm:$0xff]
    %v159 = vld [vmem:[#allocation5 + $0x1d0] sm:$0xff]
    %v160 = vld [vmem:[#allocation5 + $0x1d8] sm:$0xff]
    %v161 = vld [vmem:[#allocation5 + $0x1e0] sm:$0xff]
    %v162 = vld [vmem:[#allocation5 + $0x1e8] sm:$0xff]
    %v163 = vld [vmem:[#allocation5 + $0x1f0] sm:$0xff]
    %v164 = vld [vmem:[#allocation5 + $0x1f8] sm:$0xff]
    %v165 = vld [vmem:[#allocation5 + $0x200] sm:$0xff]
    %v166 = vld [vmem:[#allocation5 + $0x208] sm:$0xff]
    %v167 = vld [vmem:[#allocation5 + $0x210] sm:$0xff]
    %v168 = vld [vmem:[#allocation5 + $0x218] sm:$0xff]
    %v169 = vld [vmem:[#allocation5 + $0x220] sm:$0xff]
    %v170 = vld [vmem:[#allocation5 + $0x228] sm:$0xff]
    %v171 = vld [vmem:[#allocation5 + $0x230] sm:$0xff]
    %v172 = vld [vmem:[#allocation5 + $0x238] sm:$0xff]
    %v173 = vld [vmem:[#allocation5 + $0x240] sm:$0xff]
    %v174 = vld [vmem:[#allocation5 + $0x248] sm:$0xff]
    %v175 = vld [vmem:[#allocation5 + $0x250] sm:$0xff]
    %v176 = vld [vmem:[#allocation5 + $0x258] sm:$0xff]
    %v177 = vld [vmem:[#allocation5 + $0x260] sm:$0xff]
    %v178 = vld [vmem:[#allocation5 + $0x268] sm:$0xff]
    %v179 = vld [vmem:[#allocation5 + $0x270] sm:$0xff]
    %v180 = vld [vmem:[#allocation5 + $0x278] sm:$0xff]
    %v181 = vld [vmem:[#allocation5 + $0x280] sm:$0xff]
    %v182 = vld [vmem:[#allocation5 + $0x288] sm:$0xff]
    %v183 = vld [vmem:[#allocation5 + $0x290] sm:$0xff]
    %v184 = vld [vmem:[#allocation5 + $0x298] sm:$0xff]
    %v185 = vld [vmem:[#allocation5 + $0x2a0] sm:$0xff]
    %v186 = vld [vmem:[#allocation5 + $0x2a8] sm:$0xff]
    %v187 = vld [vmem:[#allocation5 + $0x2b0] sm:$0xff]
    %v188 = vld [vmem:[#allocation5 + $0x2b8] sm:$0xff]
    %v189 = vld [vmem:[#allocation5 + $0x2c0] sm:$0xff]
    %v190 = vld [vmem:[#allocation5 + $0x2c8] sm:$0xff]
    %v191 = vld [vmem:[#allocation5 + $0x2d0] sm:$0xff]
    %v192 = vld [vmem:[#allocation5 + $0x2d8] sm:$0xff]
    %v193 = vld [vmem:[#allocation5 + $0x2e0] sm:$0xff]
    %v194 = vld [vmem:[#allocation5 + $0x2e8] sm:$0xff]
    %v195 = vld [vmem:[#allocation5 + $0x2f0] sm:$0xff]
    %v196 = vld [vmem:[#allocation5 + $0x2f8] sm:$0xff]
    %v197 = vld [vmem:[#allocation5 + $0x300] sm:$0xff]
    %v198 = vld [vmem:[#allocation5 + $0x308] sm:$0xff]
    %v199 = vld [vmem:[#allocation5 + $0x310] sm:$0xff]
    %v200 = vld [vmem:[#allocation5 + $0x318] sm:$0xff]
    %v201 = vld [vmem:[#allocation5 + $0x320] sm:$0xff]
    %v202 = vld [vmem:[#allocation5 + $0x328] sm:$0xff]
    %v203 = vld [vmem:[#allocation5 + $0x330] sm:$0xff]
    %v204 = vld [vmem:[#allocation5 + $0x338] sm:$0xff]
    %v205 = vld [vmem:[#allocation5 + $0x340] sm:$0xff]
    %v206 = vld [vmem:[#allocation5 + $0x348] sm:$0xff]
    %v207 = vld [vmem:[#allocation5 + $0x350] sm:$0xff]
    %v208 = vld [vmem:[#allocation5 + $0x358] sm:$0xff]
    %v209 = vld [vmem:[#allocation5 + $0x360] sm:$0xff]
    %v210 = vld [vmem:[#allocation5 + $0x368] sm:$0xff]
    %v211 = vld [vmem:[#allocation5 + $0x370] sm:$0xff]
    %v212 = vld [vmem:[#allocation5 + $0x378] sm:$0xff]
    %v213 = vld [vmem:[#allocation5 + $0x380] sm:$0xff]
    %v214 = vld [vmem:[#allocation5 + $0x388] sm:$0xff]
    %v215 = vld [vmem:[#allocation5 + $0x390] sm:$0xff]
    %v216 = vld [vmem:[#allocation5 + $0x398] sm:$0xff]
    %v217 = vld [vmem:[#allocation5 + $0x3a0] sm:$0xff]
    %v218 = vld [vmem:[#allocation5 + $0x3a8] sm:$0xff]
    %v219 = vld [vmem:[#allocation5 + $0x3b0] sm:$0xff]
    %v220 = vld [vmem:[#allocation5 + $0x3b8] sm:$0xff]
    %v221 = vld [vmem:[#allocation5 + $0x3c0] sm:$0xff]
    %v222 = vld [vmem:[#allocation5 + $0x3c8] sm:$0xff]
    %v223 = vld [vmem:[#allocation5 + $0x3d0] sm:$0xff]
    %v224 = vld [vmem:[#allocation5 + $0x3d8] sm:$0xff]
    %v225 = vld [vmem:[#allocation5 + $0x3e0] sm:$0xff]
    %v226 = vld [vmem:[#allocation5 + $0x3e8] sm:$0xff]
    %v227 = vld [vmem:[#allocation5 + $0x3f0] sm:$0xff]
    %v228 = vld [vmem:[#allocation5 + $0x3f8] sm:$0xff]
    %v229 = vld [vmem:[#allocation5 + $0x400] sm:$0xff]
    %v230 = vld [vmem:[#allocation5 + $0x408] sm:$0xff]
    %v231 = vld [vmem:[#allocation5 + $0x410] sm:$0xff]
    %v232 = vld [vmem:[#allocation5 + $0x418] sm:$0xff]
    %v233 = vld [vmem:[#allocation5 + $0x420] sm:$0xff]
    %v234 = vld [vmem:[#allocation5 + $0x428] sm:$0xff]
    %v235 = vld [vmem:[#allocation5 + $0x430] sm:$0xff]
    %v236 = vld [vmem:[#allocation5 + $0x438] sm:$0xff]
    %v237 = vld [vmem:[#allocation5 + $0x440] sm:$0xff]
    %v238 = vld [vmem:[#allocation5 + $0x448] sm:$0xff]
    %v239 = vld [vmem:[#allocation5 + $0x450] sm:$0xff]
    %v240 = vld [vmem:[#allocation5 + $0x458] sm:$0xff]
    %v241 = vld [vmem:[#allocation5 + $0x460] sm:$0xff]
    %v242 = vld [vmem:[#allocation5 + $0x468] sm:$0xff]
    %v243 = vld [vmem:[#allocation5 + $0x470] sm:$0xff]
    %v244 = vld [vmem:[#allocation5 + $0x478] sm:$0xff]
    %v245 = vld [vmem:[#allocation5 + $0x480] sm:$0xff]
    %v246 = vld [vmem:[#allocation5 + $0x488] sm:$0xff]
    %v247 = vld [vmem:[#allocation5 + $0x490] sm:$0xff]
    %v248 = vld [vmem:[#allocation5 + $0x498] sm:$0xff]
    %v249 = vld [vmem:[#allocation5 + $0x4a0] sm:$0xff]
    %v250 = vld [vmem:[#allocation5 + $0x4a8] sm:$0xff]
    %v251 = vld [vmem:[#allocation5 + $0x4b0] sm:$0xff]
    %v252 = vld [vmem:[#allocation5 + $0x4b8] sm:$0xff]
    %v253 = vld [vmem:[#allocation5 + $0x4c0] sm:$0xff]
    %v254 = vld [vmem:[#allocation5 + $0x4c8] sm:$0xff]
    %v255 = vld [vmem:[#allocation5 + $0x4d0] sm:$0xff]
    %v256 = vld [vmem:[#allocation5 + $0x4d8] sm:$0xff]
    %v257 = vld [vmem:[#allocation5 + $0x4e0] sm:$0xff]
    %v258 = vld [vmem:[#allocation5 + $0x4e8] sm:$0xff]
    %v259 = vld [vmem:[#allocation5 + $0x4f0] sm:$0xff]
    %v260 = vld [vmem:[#allocation5 + $0x4f8] sm:$0xff]
    %v261 = vld [vmem:[#allocation5 + $0x500] sm:$0xff]
    %v262 = vld [vmem:[#allocation5 + $0x508] sm:$0xff]
    %v263 = vld [vmem:[#allocation5 + $0x510] sm:$0xff]
    %v264 = vld [vmem:[#allocation5 + $0x518] sm:$0xff]
    %v265 = vld [vmem:[#allocation5 + $0x520] sm:$0xff]
    %v266 = vld [vmem:[#allocation5 + $0x528] sm:$0xff]
    %v267 = vld [vmem:[#allocation5 + $0x530] sm:$0xff]
    %v268 = vld [vmem:[#allocation5 + $0x538] sm:$0xff]
    %v269 = vld [vmem:[#allocation5 + $0x540] sm:$0xff]
    %v270 = vld [vmem:[#allocation5 + $0x548] sm:$0xff]
    %v271 = vld [vmem:[#allocation5 + $0x550] sm:$0xff]
    %v272 = vld [vmem:[#allocation5 + $0x558] sm:$0xff]
    %v273 = vld [vmem:[#allocation5 + $0x560] sm:$0xff]
    %v274 = vld [vmem:[#allocation5 + $0x568] sm:$0xff]
    %v275 = vld [vmem:[#allocation5 + $0x570] sm:$0xff]
    %v276 = vld [vmem:[#allocation5 + $0x578] sm:$0xff]
    %v277 = vld [vmem:[#allocation5 + $0x580] sm:$0xff]
    %v278 = vld [vmem:[#allocation5 + $0x588] sm:$0xff]
    %v279 = vld [vmem:[#allocation5 + $0x590] sm:$0xff]
    %v280 = vld [vmem:[#allocation5 + $0x598] sm:$0xff]
    %v281 = vld [vmem:[#allocation5 + $0x5a0] sm:$0xff]
    %v282 = vld [vmem:[#allocation5 + $0x5a8] sm:$0xff]
    %v283 = vld [vmem:[#allocation5 + $0x5b0] sm:$0xff]
    %v284 = vld [vmem:[#allocation5 + $0x5b8] sm:$0xff]
    %v285 = vld [vmem:[#allocation5 + $0x5c0] sm:$0xff]
    %v286 = vld [vmem:[#allocation5 + $0x5c8] sm:$0xff]
    %v287 = vld [vmem:[#allocation5 + $0x5d0] sm:$0xff]
    %v288 = vld [vmem:[#allocation5 + $0x5d8] sm:$0xff]
    %v289 = vld [vmem:[#allocation5 + $0x5e0] sm:$0xff]
    %v290 = vld [vmem:[#allocation5 + $0x5e8] sm:$0xff]
    %v291 = vld [vmem:[#allocation5 + $0x5f0] sm:$0xff]
    %v292 = vld [vmem:[#allocation5 + $0x5f8] sm:$0xff]
    %v293 = vld [vmem:[%s2] sm:$0xf]
    %v295 = vlaneseq
    %v296 = vshrl.u32 %v295, 7
    %v297 = vsub.s32 0, %v296
    %v298 = vrot.slane %v293, %v297
    %v299 = vlaneseq
    %v300 = vshrl.u32 %v299, 7
    %v301 = vsub.s32 1, %v300
    %v302 = vrot.slane %v293, %v301
    %v303 = vlaneseq
    %v304 = vshrl.u32 %v303, 7
    %v305 = vsub.s32 2, %v304
    %v306 = vrot.slane %v293, %v305
    %v307 = vlaneseq
    %v308 = vshrl.u32 %v307, 7
    %v309 = vsub.s32 3, %v308
    %v310 = vrot.slane %v293, %v309
    %v507 = vunpack.c.l.b16 %v101
    %v508 = vunpack.c.h.b16 %v101
    %v509 = vunpack.c.l.b16 %v102
    %v510 = vunpack.c.h.b16 %v102
    %v511 = vunpack.c.l.b16 %v103
    %v512 = vunpack.c.h.b16 %v103
    %v513 = vunpack.c.l.b16 %v104
    %v514 = vunpack.c.h.b16 %v104
    %v515 = vunpack.c.l.b16 %v105
    %v516 = vunpack.c.h.b16 %v105
    %v517 = vunpack.c.l.b16 %v106
    %v518 = vunpack.c.h.b16 %v106
    %v519 = vunpack.c.l.b16 %v107
    %v520 = vunpack.c.h.b16 %v107
    %v521 = vunpack.c.l.b16 %v108
    %v522 = vunpack.c.h.b16 %v108
    %v523 = vunpack.c.l.b16 %v109
    %v524 = vunpack.c.h.b16 %v109
    %v525 = vunpack.c.l.b16 %v110
    %v526 = vunpack.c.h.b16 %v110
    %v527 = vunpack.c.l.b16 %v111
    %v528 = vunpack.c.h.b16 %v111
    %v529 = vunpack.c.l.b16 %v112
    %v530 = vunpack.c.h.b16 %v112
    %v531 = vunpack.c.l.b16 %v113
    %v532 = vunpack.c.h.b16 %v113
    %v533 = vunpack.c.l.b16 %v114
    %v534 = vunpack.c.h.b16 %v114
    %v535 = vunpack.c.l.b16 %v115
    %v536 = vunpack.c.h.b16 %v115
    %v537 = vunpack.c.l.b16 %v116
    %v538 = vunpack.c.h.b16 %v116
    %v539 = vunpack.c.l.b16 %v117
    %v540 = vunpack.c.h.b16 %v117
    %v541 = vunpack.c.l.b16 %v118
    %v542 = vunpack.c.h.b16 %v118
    %v543 = vunpack.c.l.b16 %v119
    %v544 = vunpack.c.h.b16 %v119
    %v545 = vunpack.c.l.b16 %v120
    %v546 = vunpack.c.h.b16 %v120
    %v547 = vunpack.c.l.b16 %v121
    %v548 = vunpack.c.h.b16 %v121
    %v549 = vunpack.c.l.b16 %v122
    %v550 = vunpack.c.h.b16 %v122
    %v551 = vunpack.c.l.b16 %v123
    %v552 = vunpack.c.h.b16 %v123
    %v553 = vunpack.c.l.b16 %v124
    %v554 = vunpack.c.h.b16 %v124
    %v555 = vunpack.c.l.b16 %v125
    %v556 = vunpack.c.h.b16 %v125
    %v557 = vunpack.c.l.b16 %v126
    %v558 = vunpack.c.h.b16 %v126
    %v559 = vunpack.c.l.b16 %v127
    %v560 = vunpack.c.h.b16 %v127
    %v561 = vunpack.c.l.b16 %v128
    %v562 = vunpack.c.h.b16 %v128
    %v563 = vunpack.c.l.b16 %v129
    %v564 = vunpack.c.h.b16 %v129
    %v565 = vunpack.c.l.b16 %v130
    %v566 = vunpack.c.h.b16 %v130
    %v567 = vunpack.c.l.b16 %v131
    %v568 = vunpack.c.h.b16 %v131
    %v569 = vunpack.c.l.b16 %v132
    %v570 = vunpack.c.h.b16 %v132
    %v571 = vunpack.c.l.b16 %v133
    %v572 = vunpack.c.h.b16 %v133
    %v573 = vunpack.c.l.b16 %v134
    %v574 = vunpack.c.h.b16 %v134
    %v575 = vunpack.c.l.b16 %v135
    %v576 = vunpack.c.h.b16 %v135
    %v577 = vunpack.c.l.b16 %v136
    %v578 = vunpack.c.h.b16 %v136
    %v579 = vunpack.c.l.b16 %v137
    %v580 = vunpack.c.h.b16 %v137
    %v581 = vunpack.c.l.b16 %v138
    %v582 = vunpack.c.h.b16 %v138
    %v583 = vunpack.c.l.b16 %v139
    %v584 = vunpack.c.h.b16 %v139
    %v585 = vunpack.c.l.b16 %v140
    %v586 = vunpack.c.h.b16 %v140
    %v587 = vunpack.c.l.b16 %v141
    %v588 = vunpack.c.h.b16 %v141
    %v589 = vunpack.c.l.b16 %v142
    %v590 = vunpack.c.h.b16 %v142
    %v591 = vunpack.c.l.b16 %v143
    %v592 = vunpack.c.h.b16 %v143
    %v593 = vunpack.c.l.b16 %v144
    %v594 = vunpack.c.h.b16 %v144
    %v595 = vunpack.c.l.b16 %v145
    %v596 = vunpack.c.h.b16 %v145
    %v597 = vunpack.c.l.b16 %v146
    %v598 = vunpack.c.h.b16 %v146
    %v599 = vunpack.c.l.b16 %v147
    %v600 = vunpack.c.h.b16 %v147
    %v601 = vunpack.c.l.b16 %v148
    %v602 = vunpack.c.h.b16 %v148
    %v603 = vunpack.c.l.b16 %v149
    %v604 = vunpack.c.h.b16 %v149
    %v605 = vunpack.c.l.b16 %v150
    %v606 = vunpack.c.h.b16 %v150
    %v607 = vunpack.c.l.b16 %v151
    %v608 = vunpack.c.h.b16 %v151
    %v609 = vunpack.c.l.b16 %v152
    %v610 = vunpack.c.h.b16 %v152
    %v611 = vunpack.c.l.b16 %v153
    %v612 = vunpack.c.h.b16 %v153
    %v613 = vunpack.c.l.b16 %v154
    %v614 = vunpack.c.h.b16 %v154
    %v615 = vunpack.c.l.b16 %v155
    %v616 = vunpack.c.h.b16 %v155
    %v617 = vunpack.c.l.b16 %v156
    %v618 = vunpack.c.h.b16 %v156
    %v619 = vunpack.c.l.b16 %v157
    %v620 = vunpack.c.h.b16 %v157
    %v621 = vunpack.c.l.b16 %v158
    %v622 = vunpack.c.h.b16 %v158
    %v623 = vunpack.c.l.b16 %v159
    %v624 = vunpack.c.h.b16 %v159
    %v625 = vunpack.c.l.b16 %v160
    %v626 = vunpack.c.h.b16 %v160
    %v627 = vunpack.c.l.b16 %v161
    %v628 = vunpack.c.h.b16 %v161
    %v629 = vunpack.c.l.b16 %v162
    %v630 = vunpack.c.h.b16 %v162
    %v631 = vunpack.c.l.b16 %v163
    %v632 = vunpack.c.h.b16 %v163
    %v633 = vunpack.c.l.b16 %v164
    %v634 = vunpack.c.h.b16 %v164
    %v635 = vunpack.c.l.b16 %v165
    %v636 = vunpack.c.h.b16 %v165
    %v637 = vunpack.c.l.b16 %v166
    %v638 = vunpack.c.h.b16 %v166
    %v639 = vunpack.c.l.b16 %v167
    %v640 = vunpack.c.h.b16 %v167
    %v641 = vunpack.c.l.b16 %v168
    %v642 = vunpack.c.h.b16 %v168
    %v643 = vunpack.c.l.b16 %v169
    %v644 = vunpack.c.h.b16 %v169
    %v645 = vunpack.c.l.b16 %v170
    %v646 = vunpack.c.h.b16 %v170
    %v647 = vunpack.c.l.b16 %v171
    %v648 = vunpack.c.h.b16 %v171
    %v649 = vunpack.c.l.b16 %v172
    %v650 = vunpack.c.h.b16 %v172
    %v651 = vunpack.c.l.b16 %v173
    %v652 = vunpack.c.h.b16 %v173
    %v653 = vunpack.c.l.b16 %v174
    %v654 = vunpack.c.h.b16 %v174
    %v655 = vunpack.c.l.b16 %v175
    %v656 = vunpack.c.h.b16 %v175
    %v657 = vunpack.c.l.b16 %v176
    %v658 = vunpack.c.h.b16 %v176
    %v659 = vunpack.c.l.b16 %v177
    %v660 = vunpack.c.h.b16 %v177
    %v661 = vunpack.c.l.b16 %v178
    %v662 = vunpack.c.h.b16 %v178
    %v663 = vunpack.c.l.b16 %v179
    %v664 = vunpack.c.h.b16 %v179
    %v665 = vunpack.c.l.b16 %v180
    %v666 = vunpack.c.h.b16 %v180
    %v667 = vunpack.c.l.b16 %v181
    %v668 = vunpack.c.h.b16 %v181
    %v669 = vunpack.c.l.b16 %v182
    %v670 = vunpack.c.h.b16 %v182
    %v671 = vunpack.c.l.b16 %v183
    %v672 = vunpack.c.h.b16 %v183
    %v673 = vunpack.c.l.b16 %v184
    %v674 = vunpack.c.h.b16 %v184
    %v675 = vunpack.c.l.b16 %v185
    %v676 = vunpack.c.h.b16 %v185
    %v677 = vunpack.c.l.b16 %v186
    %v678 = vunpack.c.h.b16 %v186
    %v679 = vunpack.c.l.b16 %v187
    %v680 = vunpack.c.h.b16 %v187
    %v681 = vunpack.c.l.b16 %v188
    %v682 = vunpack.c.h.b16 %v188
    %v683 = vunpack.c.l.b16 %v189
    %v684 = vunpack.c.h.b16 %v189
    %v685 = vunpack.c.l.b16 %v190
    %v686 = vunpack.c.h.b16 %v190
    %v687 = vunpack.c.l.b16 %v191
    %v688 = vunpack.c.h.b16 %v191
    %v689 = vunpack.c.l.b16 %v192
    %v690 = vunpack.c.h.b16 %v192
    %v691 = vunpack.c.l.b16 %v193
    %v692 = vunpack.c.h.b16 %v193
    %v693 = vunpack.c.l.b16 %v194
    %v694 = vunpack.c.h.b16 %v194
    %v695 = vunpack.c.l.b16 %v195
    %v696 = vunpack.c.h.b16 %v195
    %v697 = vunpack.c.l.b16 %v196
    %v698 = vunpack.c.h.b16 %v196
    %v699 = vunpack.c.l.b16 %v197
    %v700 = vunpack.c.h.b16 %v197
    %v701 = vunpack.c.l.b16 %v198
    %v702 = vunpack.c.h.b16 %v198
    %v703 = vunpack.c.l.b16 %v199
    %v704 = vunpack.c.h.b16 %v199
    %v705 = vunpack.c.l.b16 %v200
    %v706 = vunpack.c.h.b16 %v200
    %v707 = vunpack.c.l.b16 %v201
    %v708 = vunpack.c.h.b16 %v201
    %v709 = vunpack.c.l.b16 %v202
    %v710 = vunpack.c.h.b16 %v202
    %v711 = vunpack.c.l.b16 %v203
    %v712 = vunpack.c.h.b16 %v203
    %v713 = vunpack.c.l.b16 %v204
    %v714 = vunpack.c.h.b16 %v204
    %v715 = vunpack.c.l.b16 %v205
    %v716 = vunpack.c.h.b16 %v205
    %v717 = vunpack.c.l.b16 %v206
    %v718 = vunpack.c.h.b16 %v206
    %v719 = vunpack.c.l.b16 %v207
    %v720 = vunpack.c.h.b16 %v207
    %v721 = vunpack.c.l.b16 %v208
    %v722 = vunpack.c.h.b16 %v208
    %v723 = vunpack.c.l.b16 %v209
    %v724 = vunpack.c.h.b16 %v209
    %v725 = vunpack.c.l.b16 %v210
    %v726 = vunpack.c.h.b16 %v210
    %v727 = vunpack.c.l.b16 %v211
    %v728 = vunpack.c.h.b16 %v211
    %v729 = vunpack.c.l.b16 %v212
    %v730 = vunpack.c.h.b16 %v212
    %v731 = vunpack.c.l.b16 %v213
    %v732 = vunpack.c.h.b16 %v213
    %v733 = vunpack.c.l.b16 %v214
    %v734 = vunpack.c.h.b16 %v214
    %v735 = vunpack.c.l.b16 %v215
    %v736 = vunpack.c.h.b16 %v215
    %v737 = vunpack.c.l.b16 %v216
    %v738 = vunpack.c.h.b16 %v216
    %v739 = vunpack.c.l.b16 %v217
    %v740 = vunpack.c.h.b16 %v217
    %v741 = vunpack.c.l.b16 %v218
    %v742 = vunpack.c.h.b16 %v218
    %v743 = vunpack.c.l.b16 %v219
    %v744 = vunpack.c.h.b16 %v219
    %v745 = vunpack.c.l.b16 %v220
    %v746 = vunpack.c.h.b16 %v220
    %v747 = vunpack.c.l.b16 %v221
    %v748 = vunpack.c.h.b16 %v221
    %v749 = vunpack.c.l.b16 %v222
    %v750 = vunpack.c.h.b16 %v222
    %v751 = vunpack.c.l.b16 %v223
    %v752 = vunpack.c.h.b16 %v223
    %v753 = vunpack.c.l.b16 %v224
    %v754 = vunpack.c.h.b16 %v224
    %v755 = vunpack.c.l.b16 %v225
    %v756 = vunpack.c.h.b16 %v225
    %v757 = vunpack.c.l.b16 %v226
    %v758 = vunpack.c.h.b16 %v226
    %v759 = vunpack.c.l.b16 %v227
    %v760 = vunpack.c.h.b16 %v227
    %v761 = vunpack.c.l.b16 %v228
    %v762 = vunpack.c.h.b16 %v228
    %v763 = vunpack.c.l.b16 %v229
    %v764 = vunpack.c.h.b16 %v229
    %v765 = vunpack.c.l.b16 %v230
    %v766 = vunpack.c.h.b16 %v230
    %v767 = vunpack.c.l.b16 %v231
    %v768 = vunpack.c.h.b16 %v231
    %v769 = vunpack.c.l.b16 %v232
    %v770 = vunpack.c.h.b16 %v232
    %v771 = vunpack.c.l.b16 %v233
    %v772 = vunpack.c.h.b16 %v233
    %v773 = vunpack.c.l.b16 %v234
    %v774 = vunpack.c.h.b16 %v234
    %v775 = vunpack.c.l.b16 %v235
    %v776 = vunpack.c.h.b16 %v235
    %v777 = vunpack.c.l.b16 %v236
    %v778 = vunpack.c.h.b16 %v236
    %v779 = vunpack.c.l.b16 %v237
    %v780 = vunpack.c.h.b16 %v237
    %v781 = vunpack.c.l.b16 %v238
    %v782 = vunpack.c.h.b16 %v238
    %v783 = vunpack.c.l.b16 %v239
    %v784 = vunpack.c.h.b16 %v239
    %v785 = vunpack.c.l.b16 %v240
    %v786 = vunpack.c.h.b16 %v240
    %v787 = vunpack.c.l.b16 %v241
    %v788 = vunpack.c.h.b16 %v241
    %v789 = vunpack.c.l.b16 %v242
    %v790 = vunpack.c.h.b16 %v242
    %v791 = vunpack.c.l.b16 %v243
    %v792 = vunpack.c.h.b16 %v243
    %v793 = vunpack.c.l.b16 %v244
    %v794 = vunpack.c.h.b16 %v244
    %v795 = vunpack.c.l.b16 %v245
    %v796 = vunpack.c.h.b16 %v245
    %v797 = vunpack.c.l.b16 %v246
    %v798 = vunpack.c.h.b16 %v246
    %v799 = vunpack.c.l.b16 %v247
    %v800 = vunpack.c.h.b16 %v247
    %v801 = vunpack.c.l.b16 %v248
    %v802 = vunpack.c.h.b16 %v248
    %v803 = vunpack.c.l.b16 %v249
    %v804 = vunpack.c.h.b16 %v249
    %v805 = vunpack.c.l.b16 %v250
    %v806 = vunpack.c.h.b16 %v250
    %v807 = vunpack.c.l.b16 %v251
    %v808 = vunpack.c.h.b16 %v251
    %v809 = vunpack.c.l.b16 %v252
    %v810 = vunpack.c.h.b16 %v252
    %v811 = vunpack.c.l.b16 %v253
    %v812 = vunpack.c.h.b16 %v253
    %v813 = vunpack.c.l.b16 %v254
    %v814 = vunpack.c.h.b16 %v254
    %v815 = vunpack.c.l.b16 %v255
    %v816 = vunpack.c.h.b16 %v255
    %v817 = vunpack.c.l.b16 %v256
    %v818 = vunpack.c.h.b16 %v256
    %v819 = vunpack.c.l.b16 %v257
    %v820 = vunpack.c.h.b16 %v257
    %v821 = vunpack.c.l.b16 %v258
    %v822 = vunpack.c.h.b16 %v258
    %v823 = vunpack.c.l.b16 %v259
    %v824 = vunpack.c.h.b16 %v259
    %v825 = vunpack.c.l.b16 %v260
    %v826 = vunpack.c.h.b16 %v260
    %v827 = vunpack.c.l.b16 %v261
    %v828 = vunpack.c.h.b16 %v261
    %v829 = vunpack.c.l.b16 %v262
    %v830 = vunpack.c.h.b16 %v262
    %v831 = vunpack.c.l.b16 %v263
    %v832 = vunpack.c.h.b16 %v263
    %v833 = vunpack.c.l.b16 %v264
    %v834 = vunpack.c.h.b16 %v264
    %v835 = vunpack.c.l.b16 %v265
    %v836 = vunpack.c.h.b16 %v265
    %v837 = vunpack.c.l.b16 %v266
    %v838 = vunpack.c.h.b16 %v266
    %v839 = vunpack.c.l.b16 %v267
    %v840 = vunpack.c.h.b16 %v267
    %v841 = vunpack.c.l.b16 %v268
    %v842 = vunpack.c.h.b16 %v268
    %v843 = vunpack.c.l.b16 %v269
    %v844 = vunpack.c.h.b16 %v269
    %v845 = vunpack.c.l.b16 %v270
    %v846 = vunpack.c.h.b16 %v270
    %v847 = vunpack.c.l.b16 %v271
    %v848 = vunpack.c.h.b16 %v271
    %v849 = vunpack.c.l.b16 %v272
    %v850 = vunpack.c.h.b16 %v272
    %v851 = vunpack.c.l.b16 %v273
    %v852 = vunpack.c.h.b16 %v273
    %v853 = vunpack.c.l.b16 %v274
    %v854 = vunpack.c.h.b16 %v274
    %v855 = vunpack.c.l.b16 %v275
    %v856 = vunpack.c.h.b16 %v275
    %v857 = vunpack.c.l.b16 %v276
    %v858 = vunpack.c.h.b16 %v276
    %v859 = vunpack.c.l.b16 %v277
    %v860 = vunpack.c.h.b16 %v277
    %v861 = vunpack.c.l.b16 %v278
    %v862 = vunpack.c.h.b16 %v278
    %v863 = vunpack.c.l.b16 %v279
    %v864 = vunpack.c.h.b16 %v279
    %v865 = vunpack.c.l.b16 %v280
    %v866 = vunpack.c.h.b16 %v280
    %v867 = vunpack.c.l.b16 %v281
    %v868 = vunpack.c.h.b16 %v281
    %v869 = vunpack.c.l.b16 %v282
    %v870 = vunpack.c.h.b16 %v282
    %v871 = vunpack.c.l.b16 %v283
    %v872 = vunpack.c.h.b16 %v283
    %v873 = vunpack.c.l.b16 %v284
    %v874 = vunpack.c.h.b16 %v284
    %v875 = vunpack.c.l.b16 %v285
    %v876 = vunpack.c.h.b16 %v285
    %v877 = vunpack.c.l.b16 %v286
    %v878 = vunpack.c.h.b16 %v286
    %v879 = vunpack.c.l.b16 %v287
    %v880 = vunpack.c.h.b16 %v287
    %v881 = vunpack.c.l.b16 %v288
    %v882 = vunpack.c.h.b16 %v288
    %v883 = vunpack.c.l.b16 %v289
    %v884 = vunpack.c.h.b16 %v289
    %v885 = vunpack.c.l.b16 %v290
    %v886 = vunpack.c.h.b16 %v290
    %v887 = vunpack.c.l.b16 %v291
    %v888 = vunpack.c.h.b16 %v291
    %v889 = vunpack.c.l.b16 %v292
    %v890 = vunpack.c.h.b16 %v292
    %v891 = vpack.c.b16 %v511, %v507
    %v892 = vpack.c.b16 %v512, %v508
    %v893 = vpack.c.b16 %v513, %v509
    %v894 = vpack.c.b16 %v514, %v510
    %v895 = vpack.c.b16 %v519, %v515
    %v896 = vpack.c.b16 %v520, %v516
    %v897 = vpack.c.b16 %v521, %v517
    %v898 = vpack.c.b16 %v522, %v518
    %v899 = vpack.c.b16 %v527, %v523
    %v900 = vpack.c.b16 %v528, %v524
    %v901 = vpack.c.b16 %v529, %v525
    %v902 = vpack.c.b16 %v530, %v526
    %v903 = vpack.c.b16 %v535, %v531
    %v904 = vpack.c.b16 %v536, %v532
    %v905 = vpack.c.b16 %v537, %v533
    %v906 = vpack.c.b16 %v538, %v534
    %v907 = vpack.c.b16 %v543, %v539
    %v908 = vpack.c.b16 %v544, %v540
    %v909 = vpack.c.b16 %v545, %v541
    %v910 = vpack.c.b16 %v546, %v542
    %v911 = vpack.c.b16 %v551, %v547
    %v912 = vpack.c.b16 %v552, %v548
    %v913 = vpack.c.b16 %v553, %v549
    %v914 = vpack.c.b16 %v554, %v550
    %v915 = vpack.c.b16 %v559, %v555
    %v916 = vpack.c.b16 %v560, %v556
    %v917 = vpack.c.b16 %v561, %v557
    %v918 = vpack.c.b16 %v562, %v558
    %v919 = vpack.c.b16 %v567, %v563
    %v920 = vpack.c.b16 %v568, %v564
    %v921 = vpack.c.b16 %v569, %v565
    %v922 = vpack.c.b16 %v570, %v566
    %v923 = vpack.c.b16 %v575, %v571
    %v924 = vpack.c.b16 %v576, %v572
    %v925 = vpack.c.b16 %v577, %v573
    %v926 = vpack.c.b16 %v578, %v574
    %v927 = vpack.c.b16 %v583, %v579
    %v928 = vpack.c.b16 %v584, %v580
    %v929 = vpack.c.b16 %v585, %v581
    %v930 = vpack.c.b16 %v586, %v582
    %v931 = vpack.c.b16 %v591, %v587
    %v932 = vpack.c.b16 %v592, %v588
    %v933 = vpack.c.b16 %v593, %v589
    %v934 = vpack.c.b16 %v594, %v590
    %v935 = vpack.c.b16 %v599, %v595
    %v936 = vpack.c.b16 %v600, %v596
    %v937 = vpack.c.b16 %v601, %v597
    %v938 = vpack.c.b16 %v602, %v598
    %v939 = vpack.c.b16 %v607, %v603
    %v940 = vpack.c.b16 %v608, %v604
    %v941 = vpack.c.b16 %v609, %v605
    %v942 = vpack.c.b16 %v610, %v606
    %v943 = vpack.c.b16 %v615, %v611
    %v944 = vpack.c.b16 %v616, %v612
    %v945 = vpack.c.b16 %v617, %v613
    %v946 = vpack.c.b16 %v618, %v614
    %v947 = vpack.c.b16 %v623, %v619
    %v948 = vpack.c.b16 %v624, %v620
    %v949 = vpack.c.b16 %v625, %v621
    %v950 = vpack.c.b16 %v626, %v622
    %v951 = vpack.c.b16 %v631, %v627
    %v952 = vpack.c.b16 %v632, %v628
    %v953 = vpack.c.b16 %v633, %v629
    %v954 = vpack.c.b16 %v634, %v630
    %v955 = vpack.c.b16 %v639, %v635
    %v956 = vpack.c.b16 %v640, %v636
    %v957 = vpack.c.b16 %v641, %v637
    %v958 = vpack.c.b16 %v642, %v638
    %v959 = vpack.c.b16 %v647, %v643
    %v960 = vpack.c.b16 %v648, %v644
    %v961 = vpack.c.b16 %v649, %v645
    %v962 = vpack.c.b16 %v650, %v646
    %v963 = vpack.c.b16 %v655, %v651
    %v964 = vpack.c.b16 %v656, %v652
    %v965 = vpack.c.b16 %v657, %v653
    %v966 = vpack.c.b16 %v658, %v654
    %v967 = vpack.c.b16 %v663, %v659
    %v968 = vpack.c.b16 %v664, %v660
    %v969 = vpack.c.b16 %v665, %v661
    %v970 = vpack.c.b16 %v666, %v662
    %v971 = vpack.c.b16 %v671, %v667
    %v972 = vpack.c.b16 %v672, %v668
    %v973 = vpack.c.b16 %v673, %v669
    %v974 = vpack.c.b16 %v674, %v670
    %v975 = vpack.c.b16 %v679, %v675
    %v976 = vpack.c.b16 %v680, %v676
    %v977 = vpack.c.b16 %v681, %v677
    %v978 = vpack.c.b16 %v682, %v678
    %v979 = vpack.c.b16 %v687, %v683
    %v980 = vpack.c.b16 %v688, %v684
    %v981 = vpack.c.b16 %v689, %v685
    %v982 = vpack.c.b16 %v690, %v686
    %v983 = vpack.c.b16 %v695, %v691
    %v984 = vpack.c.b16 %v696, %v692
    %v985 = vpack.c.b16 %v697, %v693
    %v986 = vpack.c.b16 %v698, %v694
    %v987 = vpack.c.b16 %v703, %v699
    %v988 = vpack.c.b16 %v704, %v700
    %v989 = vpack.c.b16 %v705, %v701
    %v990 = vpack.c.b16 %v706, %v702
    %v991 = vpack.c.b16 %v711, %v707
    %v992 = vpack.c.b16 %v712, %v708
    %v993 = vpack.c.b16 %v713, %v709
    %v994 = vpack.c.b16 %v714, %v710
    %v995 = vpack.c.b16 %v719, %v715
    %v996 = vpack.c.b16 %v720, %v716
    %v997 = vpack.c.b16 %v721, %v717
    %v998 = vpack.c.b16 %v722, %v718
    %v999 = vpack.c.b16 %v727, %v723
    %v1000 = vpack.c.b16 %v728, %v724
    %v1001 = vpack.c.b16 %v729, %v725
    %v1002 = vpack.c.b16 %v730, %v726
    %v1003 = vpack.c.b16 %v735, %v731
    %v1004 = vpack.c.b16 %v736, %v732
    %v1005 = vpack.c.b16 %v737, %v733
    %v1006 = vpack.c.b16 %v738, %v734
    %v1007 = vpack.c.b16 %v743, %v739
    %v1008 = vpack.c.b16 %v744, %v740
    %v1009 = vpack.c.b16 %v745, %v741
    %v1010 = vpack.c.b16 %v746, %v742
    %v1011 = vpack.c.b16 %v751, %v747
    %v1012 = vpack.c.b16 %v752, %v748
    %v1013 = vpack.c.b16 %v753, %v749
    %v1014 = vpack.c.b16 %v754, %v750
    %v1015 = vpack.c.b16 %v759, %v755
    %v1016 = vpack.c.b16 %v760, %v756
    %v1017 = vpack.c.b16 %v761, %v757
    %v1018 = vpack.c.b16 %v762, %v758
    %v1019 = vpack.c.b16 %v767, %v763
    %v1020 = vpack.c.b16 %v768, %v764
    %v1021 = vpack.c.b16 %v769, %v765
    %v1022 = vpack.c.b16 %v770, %v766
    %v1023 = vpack.c.b16 %v775, %v771
    %v1024 = vpack.c.b16 %v776, %v772
    %v1025 = vpack.c.b16 %v777, %v773
    %v1026 = vpack.c.b16 %v778, %v774
    %v1027 = vpack.c.b16 %v783, %v779
    %v1028 = vpack.c.b16 %v784, %v780
    %v1029 = vpack.c.b16 %v785, %v781
    %v1030 = vpack.c.b16 %v786, %v782
    %v1031 = vpack.c.b16 %v791, %v787
    %v1032 = vpack.c.b16 %v792, %v788
    %v1033 = vpack.c.b16 %v793, %v789
    %v1034 = vpack.c.b16 %v794, %v790
    %v1035 = vpack.c.b16 %v799, %v795
    %v1036 = vpack.c.b16 %v800, %v796
    %v1037 = vpack.c.b16 %v801, %v797
    %v1038 = vpack.c.b16 %v802, %v798
    %v1039 = vpack.c.b16 %v807, %v803
    %v1040 = vpack.c.b16 %v808, %v804
    %v1041 = vpack.c.b16 %v809, %v805
    %v1042 = vpack.c.b16 %v810, %v806
    %v1043 = vpack.c.b16 %v815, %v811
    %v1044 = vpack.c.b16 %v816, %v812
    %v1045 = vpack.c.b16 %v817, %v813
    %v1046 = vpack.c.b16 %v818, %v814
    %v1047 = vpack.c.b16 %v823, %v819
    %v1048 = vpack.c.b16 %v824, %v820
    %v1049 = vpack.c.b16 %v825, %v821
    %v1050 = vpack.c.b16 %v826, %v822
    %v1051 = vpack.c.b16 %v831, %v827
    %v1052 = vpack.c.b16 %v832, %v828
    %v1053 = vpack.c.b16 %v833, %v829
    %v1054 = vpack.c.b16 %v834, %v830
    %v1055 = vpack.c.b16 %v839, %v835
    %v1056 = vpack.c.b16 %v840, %v836
    %v1057 = vpack.c.b16 %v841, %v837
    %v1058 = vpack.c.b16 %v842, %v838
    %v1059 = vpack.c.b16 %v847, %v843
    %v1060 = vpack.c.b16 %v848, %v844
    %v1061 = vpack.c.b16 %v849, %v845
    %v1062 = vpack.c.b16 %v850, %v846
    %v1063 = vpack.c.b16 %v855, %v851
    %v1064 = vpack.c.b16 %v856, %v852
    %v1065 = vpack.c.b16 %v857, %v853
    %v1066 = vpack.c.b16 %v858, %v854
    %v1067 = vpack.c.b16 %v863, %v859
    %v1068 = vpack.c.b16 %v864, %v860
    %v1069 = vpack.c.b16 %v865, %v861
    %v1070 = vpack.c.b16 %v866, %v862
    %v1071 = vpack.c.b16 %v871, %v867
    %v1072 = vpack.c.b16 %v872, %v868
    %v1073 = vpack.c.b16 %v873, %v869
    %v1074 = vpack.c.b16 %v874, %v870
    %v1075 = vpack.c.b16 %v879, %v875
    %v1076 = vpack.c.b16 %v880, %v876
    %v1077 = vpack.c.b16 %v881, %v877
    %v1078 = vpack.c.b16 %v882, %v878
    %v1079 = vpack.c.b16 %v887, %v883
    %v1080 = vpack.c.b16 %v888, %v884
    %v1081 = vpack.c.b16 %v889, %v885
    %v1082 = vpack.c.b16 %v890, %v886
    %1275 = vmatprep.subr.bf16.mxu0 %v892
    %1276 = vmatpush1.bf16.msra.mxu0 %v891
    %1277 = vmatprep.subr.bf16.mxu0 %v896
    %1278 = vmatpush1.bf16.msra.mxu0 %v895
    %1279 = vmatprep.subr.bf16.mxu0 %v900
    %1280 = vmatpush1.bf16.msra.mxu0 %v899
    %1281 = vmatprep.subr.bf16.mxu0 %v904
    %1282 = vmatpush1.bf16.msra.mxu0 %v903
    %1283 = vmatprep.subr.bf16.mxu0 %v908
    %1284 = vmatpush1.bf16.msra.mxu0 %v907
    %1285 = vmatprep.subr.bf16.mxu0 %v912
    %1286 = vmatpush1.bf16.msra.mxu0 %v911
    %1287 = vmatprep.subr.bf16.mxu0 %v916
    %1288 = vmatpush1.bf16.msra.mxu0 %v915
    %1289 = vmatprep.subr.bf16.mxu0 %v920
    %1290 = vmatpush1.bf16.msra.mxu0 %v919
    %1291 = vmatprep.subr.bf16.mxu0 %v924
    %1292 = vmatpush1.bf16.msra.mxu0 %v923
    %1293 = vmatprep.subr.bf16.mxu0 %v928
    %1294 = vmatpush1.bf16.msra.mxu0 %v927
    %1295 = vmatprep.subr.bf16.mxu0 %v932
    %1296 = vmatpush1.bf16.msra.mxu0 %v931
    %1297 = vmatprep.subr.bf16.mxu0 %v936
    %1298 = vmatpush1.bf16.msra.mxu0 %v935
    %1299 = vmatprep.subr.bf16.mxu0 %v940
    %1300 = vmatpush1.bf16.msra.mxu0 %v939
    %1301 = vmatprep.subr.bf16.mxu0 %v944
    %1302 = vmatpush1.bf16.msra.mxu0 %v943
    %1303 = vmatprep.subr.bf16.mxu0 %v948
    %1304 = vmatpush1.bf16.msra.mxu0 %v947
    %1305 = vmatprep.subr.bf16.mxu0 %v952
    %1306 = vmatpush1.bf16.msra.mxu0 %v951
    %1307 = vmatprep.mubr.bf16.mxu0 %v96
    %1308 = vmatmul.mubr.bf16.gmra.mrb[0].mxu0 %v95
    %v1309 = vpop.f32.mrb[0].mxu0
    %v1310 = vadd.f32 %v298, %v1309
    %v1311 = vpop.f32.mrb[0].mxu0
    %v1312 = vadd.f32 %v302, %v1311
    %v1313 = vpop.f32.mrb[0].mxu0
    %v1314 = vpop.f32.mrb[0].mxu0
    %1315 = vdwg.mxu0
    %1316 = vmatprep.subr.bf16.mxu0 %v956
    %1317 = vmatpush1.bf16.msra.mxu0 %v955
    %1318 = vmatprep.subr.bf16.mxu0 %v960
    %1319 = vmatpush1.bf16.msra.mxu0 %v959
    %1320 = vmatprep.subr.bf16.mxu0 %v964
    %1321 = vmatpush1.bf16.msra.mxu0 %v963
    %1322 = vmatprep.subr.bf16.mxu0 %v968
    %1323 = vmatpush1.bf16.msra.mxu0 %v967
    %1324 = vmatprep.subr.bf16.mxu0 %v972
    %1325 = vmatpush1.bf16.msra.mxu0 %v971
    %1326 = vmatprep.subr.bf16.mxu0 %v976
    %1327 = vmatpush1.bf16.msra.mxu0 %v975
    %1328 = vmatprep.subr.bf16.mxu0 %v980
    %1329 = vmatpush1.bf16.msra.mxu0 %v979
    %1330 = vmatprep.subr.bf16.mxu0 %v984
    %1331 = vmatpush1.bf16.msra.mxu0 %v983
    %1332 = vmatprep.subr.bf16.mxu0 %v988
    %1333 = vmatpush1.bf16.msra.mxu0 %v987
    %1334 = vmatprep.subr.bf16.mxu0 %v992
    %1335 = vmatpush1.bf16.msra.mxu0 %v991
    %1336 = vmatprep.subr.bf16.mxu0 %v996
    %1337 = vmatpush1.bf16.msra.mxu0 %v995
    %1338 = vmatprep.subr.bf16.mxu0 %v1000
    %1339 = vmatpush1.bf16.msra.mxu0 %v999
    %1340 = vmatprep.subr.bf16.mxu0 %v1004
    %1341 = vmatpush1.bf16.msra.mxu0 %v1003
    %1342 = vmatprep.subr.bf16.mxu0 %v1008
    %1343 = vmatpush1.bf16.msra.mxu0 %v1007
    %1344 = vmatprep.subr.bf16.mxu0 %v1012
    %1345 = vmatpush1.bf16.msra.mxu0 %v1011
    %1346 = vmatprep.subr.bf16.mxu0 %v1016
    %1347 = vmatpush1.bf16.msra.mxu0 %v1015
    %1348 = vmatprep.mubr.bf16.mxu0 %v98
    %1349 = vmatmul.mubr.bf16.gmra.mrb[0].mxu0 %v97
    %v1350 = vpop.f32.mrb[0].mxu0
    %v1351 = vadd.f32 %v1310, %v1350
    %v1352 = vpop.f32.mrb[0].mxu0
    %v1353 = vadd.f32 %v1312, %v1352
    %v1354 = vpop.f32.mrb[0].mxu0
    %v1355 = vpop.f32.mrb[0].mxu0
    %1356 = vdwg.mxu0
    %1357 = vmatprep.subr.bf16.mxu0 %v1020
    %1358 = vmatpush1.bf16.msra.mxu0 %v1019
    %1359 = vmatprep.subr.bf16.mxu0 %v1024
    %1360 = vmatpush1.bf16.msra.mxu0 %v1023
    %1361 = vmatprep.subr.bf16.mxu0 %v1028
    %1362 = vmatpush1.bf16.msra.mxu0 %v1027
    %1363 = vmatprep.subr.bf16.mxu0 %v1032
    %1364 = vmatpush1.bf16.msra.mxu0 %v1031
    %1365 = vmatprep.subr.bf16.mxu0 %v1036
    %1366 = vmatpush1.bf16.msra.mxu0 %v1035
    %1367 = vmatprep.subr.bf16.mxu0 %v1040
    %1368 = vmatpush1.bf16.msra.mxu0 %v1039
    %1369 = vmatprep.subr.bf16.mxu0 %v1044
    %1370 = vmatpush1.bf16.msra.mxu0 %v1043
    %1371 = vmatprep.subr.bf16.mxu0 %v1048
    %1372 = vmatpush1.bf16.msra.mxu0 %v1047
    %1373 = vmatprep.subr.bf16.mxu0 %v1052
    %1374 = vmatpush1.bf16.msra.mxu0 %v1051
    %1375 = vmatprep.subr.bf16.mxu0 %v1056
    %1376 = vmatpush1.bf16.msra.mxu0 %v1055
    %1377 = vmatprep.subr.bf16.mxu0 %v1060
    %1378 = vmatpush1.bf16.msra.mxu0 %v1059
    %1379 = vmatprep.subr.bf16.mxu0 %v1064
    %1380 = vmatpush1.bf16.msra.mxu0 %v1063
    %1381 = vmatprep.subr.bf16.mxu0 %v1068
    %1382 = vmatpush1.bf16.msra.mxu0 %v1067
    %1383 = vmatprep.subr.bf16.mxu0 %v1072
    %1384 = vmatpush1.bf16.msra.mxu0 %v1071
    %1385 = vmatprep.subr.bf16.mxu0 %v1076
    %1386 = vmatpush1.bf16.msra.mxu0 %v1075
    %1387 = vmatprep.subr.bf16.mxu0 %v1080
    %1388 = vmatpush1.bf16.msra.mxu0 %v1079
    %1389 = vmatprep.mubr.bf16.mxu0 %v100
    %1390 = vmatmul.mubr.bf16.gmra.mrb[0].mxu0 %v99
    %v1391 = vpop.f32.mrb[0].mxu0
    %v1392 = vadd.f32 %v1351, %v1391
    %v1393 = vpop.f32.mrb[0].mxu0
    %v1394 = vadd.f32 %v1353, %v1393
    %v1395 = vpop.f32.mrb[0].mxu0
    %v1396 = vpop.f32.mrb[0].mxu0
    %1397 = vdwg.mxu0
    %1398 = vmatprep.subr.bf16.mxu0 %v894
    %1399 = vmatpush1.bf16.msra.mxu0 %v893
    %1400 = vmatprep.subr.bf16.mxu0 %v898
    %1401 = vmatpush1.bf16.msra.mxu0 %v897
    %1402 = vmatprep.subr.bf16.mxu0 %v902
    %1403 = vmatpush1.bf16.msra.mxu0 %v901
    %1404 = vmatprep.subr.bf16.mxu0 %v906
    %1405 = vmatpush1.bf16.msra.mxu0 %v905
    %1406 = vmatprep.subr.bf16.mxu0 %v910
    %1407 = vmatpush1.bf16.msra.mxu0 %v909
    %1408 = vmatprep.subr.bf16.mxu0 %v914
    %1409 = vmatpush1.bf16.msra.mxu0 %v913
    %1410 = vmatprep.subr.bf16.mxu0 %v918
    %1411 = vmatpush1.bf16.msra.mxu0 %v917
    %1412 = vmatprep.subr.bf16.mxu0 %v922
    %1413 = vmatpush1.bf16.msra.mxu0 %v921
    %1414 = vmatprep.subr.bf16.mxu0 %v926
    %1415 = vmatpush1.bf16.msra.mxu0 %v925
    %1416 = vmatprep.subr.bf16.mxu0 %v930
    %1417 = vmatpush1.bf16.msra.mxu0 %v929
    %1418 = vmatprep.subr.bf16.mxu0 %v934
    %1419 = vmatpush1.bf16.msra.mxu0 %v933
    %1420 = vmatprep.subr.bf16.mxu0 %v938
    %1421 = vmatpush1.bf16.msra.mxu0 %v937
    %1422 = vmatprep.subr.bf16.mxu0 %v942
    %1423 = vmatpush1.bf16.msra.mxu0 %v941
    %1424 = vmatprep.subr.bf16.mxu0 %v946
    %1425 = vmatpush1.bf16.msra.mxu0 %v945
    %1426 = vmatprep.subr.bf16.mxu0 %v950
    %1427 = vmatpush1.bf16.msra.mxu0 %v949
    %1428 = vmatprep.subr.bf16.mxu0 %v954
    %1429 = vmatpush1.bf16.msra.mxu0 %v953
    %1430 = vmatprep.mubr.bf16.mxu0 %v96
    %1431 = vmatmul.mubr.bf16.gmra.mrb[0].mxu0 %v95
    %v1432 = vpop.f32.mrb[0].mxu0
    %v1433 = vadd.f32 %v306, %v1432
    %v1434 = vpop.f32.mrb[0].mxu0
    %v1435 = vadd.f32 %v310, %v1434
    %v1436 = vpop.f32.mrb[0].mxu0
    %v1437 = vpop.f32.mrb[0].mxu0
    %1438 = vdwg.mxu0
    %1439 = vmatprep.subr.bf16.mxu0 %v958
    %1440 = vmatpush1.bf16.msra.mxu0 %v957
    %1441 = vmatprep.subr.bf16.mxu0 %v962
    %1442 = vmatpush1.bf16.msra.mxu0 %v961
    %1443 = vmatprep.subr.bf16.mxu0 %v966
    %1444 = vmatpush1.bf16.msra.mxu0 %v965
    %1445 = vmatprep.subr.bf16.mxu0 %v970
    %1446 = vmatpush1.bf16.msra.mxu0 %v969
    %1447 = vmatprep.subr.bf16.mxu0 %v974
    %1448 = vmatpush1.bf16.msra.mxu0 %v973
    %1449 = vmatprep.subr.bf16.mxu0 %v978
    %1450 = vmatpush1.bf16.msra.mxu0 %v977
    %1451 = vmatprep.subr.bf16.mxu0 %v982
    %1452 = vmatpush1.bf16.msra.mxu0 %v981
    %1453 = vmatprep.subr.bf16.mxu0 %v986
    %1454 = vmatpush1.bf16.msra.mxu0 %v985
    %1455 = vmatprep.subr.bf16.mxu0 %v990
    %1456 = vmatpush1.bf16.msra.mxu0 %v989
    %1457 = vmatprep.subr.bf16.mxu0 %v994
    %1458 = vmatpush1.bf16.msra.mxu0 %v993
    %1459 = vmatprep.subr.bf16.mxu0 %v998
    %1460 = vmatpush1.bf16.msra.mxu0 %v997
    %1461 = vmatprep.subr.bf16.mxu0 %v1002
    %1462 = vmatpush1.bf16.msra.mxu0 %v1001
    %1463 = vmatprep.subr.bf16.mxu0 %v1006
    %1464 = vmatpush1.bf16.msra.mxu0 %v1005
    %1465 = vmatprep.subr.bf16.mxu0 %v1010
    %1466 = vmatpush1.bf16.msra.mxu0 %v1009
    %1467 = vmatprep.subr.bf16.mxu0 %v1014
    %1468 = vmatpush1.bf16.msra.mxu0 %v1013
    %1469 = vmatprep.subr.bf16.mxu0 %v1018
    %1470 = vmatpush1.bf16.msra.mxu0 %v1017
    %1471 = vmatprep.mubr.bf16.mxu0 %v98
    %1472 = vmatmul.mubr.bf16.gmra.mrb[0].mxu0 %v97
    %v1473 = vpop.f32.mrb[0].mxu0
    %v1474 = vadd.f32 %v1433, %v1473
    %v1475 = vpop.f32.mrb[0].mxu0
    %v1476 = vadd.f32 %v1435, %v1475
    %v1477 = vpop.f32.mrb[0].mxu0
    %v1478 = vpop.f32.mrb[0].mxu0
    %1479 = vdwg.mxu0
    %1480 = vmatprep.subr.bf16.mxu0 %v1022
    %1481 = vmatpush1.bf16.msra.mxu0 %v1021
    %1482 = vmatprep.subr.bf16.mxu0 %v1026
    %1483 = vmatpush1.bf16.msra.mxu0 %v1025
    %1484 = vmatprep.subr.bf16.mxu0 %v1030
    %1485 = vmatpush1.bf16.msra.mxu0 %v1029
    %1486 = vmatprep.subr.bf16.mxu0 %v1034
    %1487 = vmatpush1.bf16.msra.mxu0 %v1033
    %1488 = vmatprep.subr.bf16.mxu0 %v1038
    %1489 = vmatpush1.bf16.msra.mxu0 %v1037
    %1490 = vmatprep.subr.bf16.mxu0 %v1042
    %1491 = vmatpush1.bf16.msra.mxu0 %v1041
    %1492 = vmatprep.subr.bf16.mxu0 %v1046
    %1493 = vmatpush1.bf16.msra.mxu0 %v1045
    %1494 = vmatprep.subr.bf16.mxu0 %v1050
    %1495 = vmatpush1.bf16.msra.mxu0 %v1049
    %1496 = vmatprep.subr.bf16.mxu0 %v1054
    %1497 = vmatpush1.bf16.msra.mxu0 %v1053
    %1498 = vmatprep.subr.bf16.mxu0 %v1058
    %1499 = vmatpush1.bf16.msra.mxu0 %v1057
    %1500 = vmatprep.subr.bf16.mxu0 %v1062
    %1501 = vmatpush1.bf16.msra.mxu0 %v1061
    %1502 = vmatprep.subr.bf16.mxu0 %v1066
    %1503 = vmatpush1.bf16.msra.mxu0 %v1065
    %1504 = vmatprep.subr.bf16.mxu0 %v1070
    %1505 = vmatpush1.bf16.msra.mxu0 %v1069
    %1506 = vmatprep.subr.bf16.mxu0 %v1074
    %1507 = vmatpush1.bf16.msra.mxu0 %v1073
    %1508 = vmatprep.subr.bf16.mxu0 %v1078
    %1509 = vmatpush1.bf16.msra.mxu0 %v1077
    %1510 = vmatprep.subr.bf16.mxu0 %v1082
    %1511 = vmatpush1.bf16.msra.mxu0 %v1081
    %1512 = vmatprep.mubr.bf16.mxu0 %v100
    %1513 = vmatmul.mubr.bf16.gmra.mrb[0].mxu0 %v99
    %v1514 = vpop.f32.mrb[0].mxu0
    %v1515 = vadd.f32 %v1474, %v1514
    %v1516 = vpop.f32.mrb[0].mxu0
    %v1517 = vadd.f32 %v1476, %v1516
    %v1518 = vpop.f32.mrb[0].mxu0
    %v1519 = vpop.f32.mrb[0].mxu0
    %1520 = vdwg.mxu0
    %v1521 = vmax.f32 %v1392, 0.0
    %v1522 = vmax.f32 %v1394, 0.0
    %v1523 = vmax.f32 %v1515, 0.0
    %v1524 = vmax.f32 %v1517, 0.0
    %v1525 = vpack.c.bf16 %v1521, %v1521
    %v1526 = vpack.c.bf16 %v1522, %v1522
    %v1527 = vpack.c.bf16 %v1523, %v1523
    %v1528 = vpack.c.bf16 %v1524, %v1524
    %v1529 = vld [vmem:[#allocation7] sm:$0xff]
    %v1530 = vld [vmem:[#allocation7 + $0x8] sm:$0xff]
    %v1531 = vld [vmem:[#allocation7 + $0x10] sm:$0xff]
    %v1532 = vld [vmem:[#allocation7 + $0x18] sm:$0xff]
    %v1533 = vld [vmem:[#allocation7 + $0x20] sm:$0xff]
    %v1534 = vld [vmem:[#allocation7 + $0x28] sm:$0xff]
    %v1535 = vld [vmem:[#allocation7 + $0x30] sm:$0xff]
    %v1536 = vld [vmem:[#allocation7 + $0x38] sm:$0xff]
    %v1537 = vld [vmem:[#allocation7 + $0x40] sm:$0xff]
    %v1538 = vld [vmem:[#allocation7 + $0x48] sm:$0xff]
    %v1539 = vld [vmem:[#allocation7 + $0x50] sm:$0xff]
    %v1540 = vld [vmem:[#allocation7 + $0x58] sm:$0xff]
    %v1541 = vld [vmem:[#allocation7 + $0x60] sm:$0xff]
    %v1542 = vld [vmem:[#allocation7 + $0x68] sm:$0xff]
    %v1543 = vld [vmem:[#allocation7 + $0x70] sm:$0xff]
    %v1544 = vld [vmem:[#allocation7 + $0x78] sm:$0xff]
    %v1545 = vld [vmem:[#allocation7 + $0x80] sm:$0xff]
    %v1546 = vld [vmem:[#allocation7 + $0x88] sm:$0xff]
    %v1547 = vld [vmem:[#allocation7 + $0x90] sm:$0xff]
    %v1548 = vld [vmem:[#allocation7 + $0x98] sm:$0xff]
    %v1549 = vld [vmem:[#allocation7 + $0xa0] sm:$0xff]
    %v1550 = vld [vmem:[#allocation7 + $0xa8] sm:$0xff]
    %v1551 = vld [vmem:[#allocation7 + $0xb0] sm:$0xff]
    %v1552 = vld [vmem:[#allocation7 + $0xb8] sm:$0xff]
    %v1553 = vld [vmem:[#allocation7 + $0xc0] sm:$0xff]
    %v1554 = vld [vmem:[#allocation7 + $0xc8] sm:$0xff]
    %v1555 = vld [vmem:[#allocation7 + $0xd0] sm:$0xff]
    %v1556 = vld [vmem:[#allocation7 + $0xd8] sm:$0xff]
    %v1557 = vld [vmem:[#allocation7 + $0xe0] sm:$0xff]
    %v1558 = vld [vmem:[#allocation7 + $0xe8] sm:$0xff]
    %v1559 = vld [vmem:[#allocation7 + $0xf0] sm:$0xff]
    %v1560 = vld [vmem:[#allocation7 + $0xf8] sm:$0xff]
    %v1561 = vld [vmem:[#allocation7 + $0x100] sm:$0xff]
    %v1562 = vld [vmem:[#allocation7 + $0x108] sm:$0xff]
    %v1563 = vld [vmem:[#allocation7 + $0x110] sm:$0xff]
    %v1564 = vld [vmem:[#allocation7 + $0x118] sm:$0xff]
    %v1565 = vld [vmem:[#allocation7 + $0x120] sm:$0xff]
    %v1566 = vld [vmem:[#allocation7 + $0x128] sm:$0xff]
    %v1567 = vld [vmem:[#allocation7 + $0x130] sm:$0xff]
    %v1568 = vld [vmem:[#allocation7 + $0x138] sm:$0xff]
    %v1569 = vld [vmem:[#allocation7 + $0x140] sm:$0xff]
    %v1570 = vld [vmem:[#allocation7 + $0x148] sm:$0xff]
    %v1571 = vld [vmem:[#allocation7 + $0x150] sm:$0xff]
    %v1572 = vld [vmem:[#allocation7 + $0x158] sm:$0xff]
    %v1573 = vld [vmem:[#allocation7 + $0x160] sm:$0xff]
    %v1574 = vld [vmem:[#allocation7 + $0x168] sm:$0xff]
    %v1575 = vld [vmem:[#allocation7 + $0x170] sm:$0xff]
    %v1576 = vld [vmem:[#allocation7 + $0x178] sm:$0xff]
    %v1577 = vld [vmem:[#allocation7 + $0x180] sm:$0xff]
    %v1578 = vld [vmem:[#allocation7 + $0x188] sm:$0xff]
    %v1579 = vld [vmem:[#allocation7 + $0x190] sm:$0xff]
    %v1580 = vld [vmem:[#allocation7 + $0x198] sm:$0xff]
    %v1581 = vld [vmem:[#allocation7 + $0x1a0] sm:$0xff]
    %v1582 = vld [vmem:[#allocation7 + $0x1a8] sm:$0xff]
    %v1583 = vld [vmem:[#allocation7 + $0x1b0] sm:$0xff]
    %v1584 = vld [vmem:[#allocation7 + $0x1b8] sm:$0xff]
    %v1585 = vld [vmem:[#allocation7 + $0x1c0] sm:$0xff]
    %v1586 = vld [vmem:[#allocation7 + $0x1c8] sm:$0xff]
    %v1587 = vld [vmem:[#allocation7 + $0x1d0] sm:$0xff]
    %v1588 = vld [vmem:[#allocation7 + $0x1d8] sm:$0xff]
    %v1589 = vld [vmem:[#allocation7 + $0x1e0] sm:$0xff]
    %v1590 = vld [vmem:[#allocation7 + $0x1e8] sm:$0xff]
    %v1591 = vld [vmem:[#allocation7 + $0x1f0] sm:$0xff]
    %v1592 = vld [vmem:[#allocation7 + $0x1f8] sm:$0xff]
    %v1593 = vld [vmem:[#allocation7 + $0x200] sm:$0xff]
    %v1594 = vld [vmem:[#allocation7 + $0x208] sm:$0xff]
    %v1595 = vld [vmem:[#allocation7 + $0x210] sm:$0xff]
    %v1596 = vld [vmem:[#allocation7 + $0x218] sm:$0xff]
    %v1597 = vld [vmem:[#allocation7 + $0x220] sm:$0xff]
    %v1598 = vld [vmem:[#allocation7 + $0x228] sm:$0xff]
    %v1599 = vld [vmem:[#allocation7 + $0x230] sm:$0xff]
    %v1600 = vld [vmem:[#allocation7 + $0x238] sm:$0xff]
    %v1601 = vld [vmem:[#allocation7 + $0x240] sm:$0xff]
    %v1602 = vld [vmem:[#allocation7 + $0x248] sm:$0xff]
    %v1603 = vld [vmem:[#allocation7 + $0x250] sm:$0xff]
    %v1604 = vld [vmem:[#allocation7 + $0x258] sm:$0xff]
    %v1605 = vld [vmem:[#allocation7 + $0x260] sm:$0xff]
    %v1606 = vld [vmem:[#allocation7 + $0x268] sm:$0xff]
    %v1607 = vld [vmem:[#allocation7 + $0x270] sm:$0xff]
    %v1608 = vld [vmem:[#allocation7 + $0x278] sm:$0xff]
    %v1609 = vld [vmem:[#allocation7 + $0x280] sm:$0xff]
    %v1610 = vld [vmem:[#allocation7 + $0x288] sm:$0xff]
    %v1611 = vld [vmem:[#allocation7 + $0x290] sm:$0xff]
    %v1612 = vld [vmem:[#allocation7 + $0x298] sm:$0xff]
    %v1613 = vld [vmem:[#allocation7 + $0x2a0] sm:$0xff]
    %v1614 = vld [vmem:[#allocation7 + $0x2a8] sm:$0xff]
    %v1615 = vld [vmem:[#allocation7 + $0x2b0] sm:$0xff]
    %v1616 = vld [vmem:[#allocation7 + $0x2b8] sm:$0xff]
    %v1617 = vld [vmem:[#allocation7 + $0x2c0] sm:$0xff]
    %v1618 = vld [vmem:[#allocation7 + $0x2c8] sm:$0xff]
    %v1619 = vld [vmem:[#allocation7 + $0x2d0] sm:$0xff]
    %v1620 = vld [vmem:[#allocation7 + $0x2d8] sm:$0xff]
    %v1621 = vld [vmem:[#allocation7 + $0x2e0] sm:$0xff]
    %v1622 = vld [vmem:[#allocation7 + $0x2e8] sm:$0xff]
    %v1623 = vld [vmem:[#allocation7 + $0x2f0] sm:$0xff]
    %v1624 = vld [vmem:[#allocation7 + $0x2f8] sm:$0xff]
    %v1625 = vld [vmem:[#allocation7 + $0x300] sm:$0xff]
    %v1626 = vld [vmem:[#allocation7 + $0x308] sm:$0xff]
    %v1627 = vld [vmem:[#allocation7 + $0x310] sm:$0xff]
    %v1628 = vld [vmem:[#allocation7 + $0x318] sm:$0xff]
    %v1629 = vld [vmem:[#allocation7 + $0x320] sm:$0xff]
    %v1630 = vld [vmem:[#allocation7 + $0x328] sm:$0xff]
    %v1631 = vld [vmem:[#allocation7 + $0x330] sm:$0xff]
    %v1632 = vld [vmem:[#allocation7 + $0x338] sm:$0xff]
    %v1633 = vld [vmem:[#allocation7 + $0x340] sm:$0xff]
    %v1634 = vld [vmem:[#allocation7 + $0x348] sm:$0xff]
    %v1635 = vld [vmem:[#allocation7 + $0x350] sm:$0xff]
    %v1636 = vld [vmem:[#allocation7 + $0x358] sm:$0xff]
    %v1637 = vld [vmem:[#allocation7 + $0x360] sm:$0xff]
    %v1638 = vld [vmem:[#allocation7 + $0x368] sm:$0xff]
    %v1639 = vld [vmem:[#allocation7 + $0x370] sm:$0xff]
    %v1640 = vld [vmem:[#allocation7 + $0x378] sm:$0xff]
    %v1641 = vld [vmem:[#allocation7 + $0x380] sm:$0xff]
    %v1642 = vld [vmem:[#allocation7 + $0x388] sm:$0xff]
    %v1643 = vld [vmem:[#allocation7 + $0x390] sm:$0xff]
    %v1644 = vld [vmem:[#allocation7 + $0x398] sm:$0xff]
    %v1645 = vld [vmem:[#allocation7 + $0x3a0] sm:$0xff]
    %v1646 = vld [vmem:[#allocation7 + $0x3a8] sm:$0xff]
    %v1647 = vld [vmem:[#allocation7 + $0x3b0] sm:$0xff]
    %v1648 = vld [vmem:[#allocation7 + $0x3b8] sm:$0xff]
    %v1649 = vld [vmem:[#allocation7 + $0x3c0] sm:$0xff]
    %v1650 = vld [vmem:[#allocation7 + $0x3c8] sm:$0xff]
    %v1651 = vld [vmem:[#allocation7 + $0x3d0] sm:$0xff]
    %v1652 = vld [vmem:[#allocation7 + $0x3d8] sm:$0xff]
    %v1653 = vld [vmem:[#allocation7 + $0x3e0] sm:$0xff]
    %v1654 = vld [vmem:[#allocation7 + $0x3e8] sm:$0xff]
    %v1655 = vld [vmem:[#allocation7 + $0x3f0] sm:$0xff]
    %v1656 = vld [vmem:[#allocation7 + $0x3f8] sm:$0xff]
    %v1657 = vld [vmem:[#allocation7 + $0x400] sm:$0xff]
    %v1658 = vld [vmem:[#allocation7 + $0x408] sm:$0xff]
    %v1659 = vld [vmem:[#allocation7 + $0x410] sm:$0xff]
    %v1660 = vld [vmem:[#allocation7 + $0x418] sm:$0xff]
    %v1661 = vld [vmem:[#allocation7 + $0x420] sm:$0xff]
    %v1662 = vld [vmem:[#allocation7 + $0x428] sm:$0xff]
    %v1663 = vld [vmem:[#allocation7 + $0x430] sm:$0xff]
    %v1664 = vld [vmem:[#allocation7 + $0x438] sm:$0xff]
    %v1665 = vld [vmem:[#allocation7 + $0x440] sm:$0xff]
    %v1666 = vld [vmem:[#allocation7 + $0x448] sm:$0xff]
    %v1667 = vld [vmem:[#allocation7 + $0x450] sm:$0xff]
    %v1668 = vld [vmem:[#allocation7 + $0x458] sm:$0xff]
    %v1669 = vld [vmem:[#allocation7 + $0x460] sm:$0xff]
    %v1670 = vld [vmem:[#allocation7 + $0x468] sm:$0xff]
    %v1671 = vld [vmem:[#allocation7 + $0x470] sm:$0xff]
    %v1672 = vld [vmem:[#allocation7 + $0x478] sm:$0xff]
    %v1673 = vld [vmem:[#allocation7 + $0x480] sm:$0xff]
    %v1674 = vld [vmem:[#allocation7 + $0x488] sm:$0xff]
    %v1675 = vld [vmem:[#allocation7 + $0x490] sm:$0xff]
    %v1676 = vld [vmem:[#allocation7 + $0x498] sm:$0xff]
    %v1677 = vld [vmem:[#allocation7 + $0x4a0] sm:$0xff]
    %v1678 = vld [vmem:[#allocation7 + $0x4a8] sm:$0xff]
    %v1679 = vld [vmem:[#allocation7 + $0x4b0] sm:$0xff]
    %v1680 = vld [vmem:[#allocation7 + $0x4b8] sm:$0xff]
    %v1681 = vld [vmem:[#allocation7 + $0x4c0] sm:$0xff]
    %v1682 = vld [vmem:[#allocation7 + $0x4c8] sm:$0xff]
    %v1683 = vld [vmem:[#allocation7 + $0x4d0] sm:$0xff]
    %v1684 = vld [vmem:[#allocation7 + $0x4d8] sm:$0xff]
    %v1685 = vld [vmem:[#allocation7 + $0x4e0] sm:$0xff]
    %v1686 = vld [vmem:[#allocation7 + $0x4e8] sm:$0xff]
    %v1687 = vld [vmem:[#allocation7 + $0x4f0] sm:$0xff]
    %v1688 = vld [vmem:[#allocation7 + $0x4f8] sm:$0xff]
    %v1689 = vld [vmem:[#allocation7 + $0x500] sm:$0xff]
    %v1690 = vld [vmem:[#allocation7 + $0x508] sm:$0xff]
    %v1691 = vld [vmem:[#allocation7 + $0x510] sm:$0xff]
    %v1692 = vld [vmem:[#allocation7 + $0x518] sm:$0xff]
    %v1693 = vld [vmem:[#allocation7 + $0x520] sm:$0xff]
    %v1694 = vld [vmem:[#allocation7 + $0x528] sm:$0xff]
    %v1695 = vld [vmem:[#allocation7 + $0x530] sm:$0xff]
    %v1696 = vld [vmem:[#allocation7 + $0x538] sm:$0xff]
    %v1697 = vld [vmem:[#allocation7 + $0x540] sm:$0xff]
    %v1698 = vld [vmem:[#allocation7 + $0x548] sm:$0xff]
    %v1699 = vld [vmem:[#allocation7 + $0x550] sm:$0xff]
    %v1700 = vld [vmem:[#allocation7 + $0x558] sm:$0xff]
    %v1701 = vld [vmem:[#allocation7 + $0x560] sm:$0xff]
    %v1702 = vld [vmem:[#allocation7 + $0x568] sm:$0xff]
    %v1703 = vld [vmem:[#allocation7 + $0x570] sm:$0xff]
    %v1704 = vld [vmem:[#allocation7 + $0x578] sm:$0xff]
    %v1705 = vld [vmem:[#allocation7 + $0x580] sm:$0xff]
    %v1706 = vld [vmem:[#allocation7 + $0x588] sm:$0xff]
    %v1707 = vld [vmem:[#allocation7 + $0x590] sm:$0xff]
    %v1708 = vld [vmem:[#allocation7 + $0x598] sm:$0xff]
    %v1709 = vld [vmem:[#allocation7 + $0x5a0] sm:$0xff]
    %v1710 = vld [vmem:[#allocation7 + $0x5a8] sm:$0xff]
    %v1711 = vld [vmem:[#allocation7 + $0x5b0] sm:$0xff]
    %v1712 = vld [vmem:[#allocation7 + $0x5b8] sm:$0xff]
    %v1713 = vld [vmem:[#allocation7 + $0x5c0] sm:$0xff]
    %v1714 = vld [vmem:[#allocation7 + $0x5c8] sm:$0xff]
    %v1715 = vld [vmem:[#allocation7 + $0x5d0] sm:$0xff]
    %v1716 = vld [vmem:[#allocation7 + $0x5d8] sm:$0xff]
    %v1717 = vld [vmem:[#allocation7 + $0x5e0] sm:$0xff]
    %v1718 = vld [vmem:[#allocation7 + $0x5e8] sm:$0xff]
    %v1719 = vld [vmem:[#allocation7 + $0x5f0] sm:$0xff]
    %v1720 = vld [vmem:[#allocation7 + $0x5f8] sm:$0xff]
    %v1721 = vld [vmem:[#allocation7 + $0x600] sm:$0xff]
    %v1722 = vld [vmem:[#allocation7 + $0x608] sm:$0xff]
    %v1723 = vld [vmem:[#allocation7 + $0x610] sm:$0xff]
    %v1724 = vld [vmem:[#allocation7 + $0x618] sm:$0xff]
    %v1725 = vld [vmem:[#allocation7 + $0x620] sm:$0xff]
    %v1726 = vld [vmem:[#allocation7 + $0x628] sm:$0xff]
    %v1727 = vld [vmem:[#allocation7 + $0x630] sm:$0xff]
    %v1728 = vld [vmem:[#allocation7 + $0x638] sm:$0xff]
    %v1729 = vld [vmem:[#allocation7 + $0x640] sm:$0xff]
    %v1730 = vld [vmem:[#allocation7 + $0x648] sm:$0xff]
    %v1731 = vld [vmem:[#allocation7 + $0x650] sm:$0xff]
    %v1732 = vld [vmem:[#allocation7 + $0x658] sm:$0xff]
    %v1733 = vld [vmem:[#allocation7 + $0x660] sm:$0xff]
    %v1734 = vld [vmem:[#allocation7 + $0x668] sm:$0xff]
    %v1735 = vld [vmem:[#allocation7 + $0x670] sm:$0xff]
    %v1736 = vld [vmem:[#allocation7 + $0x678] sm:$0xff]
    %v1737 = vld [vmem:[#allocation7 + $0x680] sm:$0xff]
    %v1738 = vld [vmem:[#allocation7 + $0x688] sm:$0xff]
    %v1739 = vld [vmem:[#allocation7 + $0x690] sm:$0xff]
    %v1740 = vld [vmem:[#allocation7 + $0x698] sm:$0xff]
    %v1741 = vld [vmem:[#allocation7 + $0x6a0] sm:$0xff]
    %v1742 = vld [vmem:[#allocation7 + $0x6a8] sm:$0xff]
    %v1743 = vld [vmem:[#allocation7 + $0x6b0] sm:$0xff]
    %v1744 = vld [vmem:[#allocation7 + $0x6b8] sm:$0xff]
    %v1745 = vld [vmem:[#allocation7 + $0x6c0] sm:$0xff]
    %v1746 = vld [vmem:[#allocation7 + $0x6c8] sm:$0xff]
    %v1747 = vld [vmem:[#allocation7 + $0x6d0] sm:$0xff]
    %v1748 = vld [vmem:[#allocation7 + $0x6d8] sm:$0xff]
    %v1749 = vld [vmem:[#allocation7 + $0x6e0] sm:$0xff]
    %v1750 = vld [vmem:[#allocation7 + $0x6e8] sm:$0xff]
    %v1751 = vld [vmem:[#allocation7 + $0x6f0] sm:$0xff]
    %v1752 = vld [vmem:[#allocation7 + $0x6f8] sm:$0xff]
    %v1753 = vld [vmem:[#allocation7 + $0x700] sm:$0xff]
    %v1754 = vld [vmem:[#allocation7 + $0x708] sm:$0xff]
    %v1755 = vld [vmem:[#allocation7 + $0x710] sm:$0xff]
    %v1756 = vld [vmem:[#allocation7 + $0x718] sm:$0xff]
    %v1757 = vld [vmem:[#allocation7 + $0x720] sm:$0xff]
    %v1758 = vld [vmem:[#allocation7 + $0x728] sm:$0xff]
    %v1759 = vld [vmem:[#allocation7 + $0x730] sm:$0xff]
    %v1760 = vld [vmem:[#allocation7 + $0x738] sm:$0xff]
    %v1761 = vld [vmem:[#allocation7 + $0x740] sm:$0xff]
    %v1762 = vld [vmem:[#allocation7 + $0x748] sm:$0xff]
    %v1763 = vld [vmem:[#allocation7 + $0x750] sm:$0xff]
    %v1764 = vld [vmem:[#allocation7 + $0x758] sm:$0xff]
    %v1765 = vld [vmem:[#allocation7 + $0x760] sm:$0xff]
    %v1766 = vld [vmem:[#allocation7 + $0x768] sm:$0xff]
    %v1767 = vld [vmem:[#allocation7 + $0x770] sm:$0xff]
    %v1768 = vld [vmem:[#allocation7 + $0x778] sm:$0xff]
    %v1769 = vld [vmem:[#allocation7 + $0x780] sm:$0xff]
    %v1770 = vld [vmem:[#allocation7 + $0x788] sm:$0xff]
    %v1771 = vld [vmem:[#allocation7 + $0x790] sm:$0xff]
    %v1772 = vld [vmem:[#allocation7 + $0x798] sm:$0xff]
    %v1773 = vld [vmem:[#allocation7 + $0x7a0] sm:$0xff]
    %v1774 = vld [vmem:[#allocation7 + $0x7a8] sm:$0xff]
    %v1775 = vld [vmem:[#allocation7 + $0x7b0] sm:$0xff]
    %v1776 = vld [vmem:[#allocation7 + $0x7b8] sm:$0xff]
    %v1777 = vld [vmem:[#allocation7 + $0x7c0] sm:$0xff]
    %v1778 = vld [vmem:[#allocation7 + $0x7c8] sm:$0xff]
    %v1779 = vld [vmem:[#allocation7 + $0x7d0] sm:$0xff]
    %v1780 = vld [vmem:[#allocation7 + $0x7d8] sm:$0xff]
    %v1781 = vld [vmem:[#allocation7 + $0x7e0] sm:$0xff]
    %v1782 = vld [vmem:[#allocation7 + $0x7e8] sm:$0xff]
    %v1783 = vld [vmem:[#allocation7 + $0x7f0] sm:$0xff]
    %v1784 = vld [vmem:[#allocation7 + $0x7f8] sm:$0xff]
    %v1785 = vld [vmem:[%s4] sm:$0xff]
    %v1787 = vlaneseq
    %v1788 = vshrl.u32 %v1787, 7
    %v1789 = vsub.s32 0, %v1788
    %v1790 = vrot.slane %v1785, %v1789
    %v1791 = vlaneseq
    %v1792 = vshrl.u32 %v1791, 7
    %v1793 = vsub.s32 1, %v1792
    %v1794 = vrot.slane %v1785, %v1793
    %v1795 = vlaneseq
    %v1796 = vshrl.u32 %v1795, 7
    %v1797 = vsub.s32 2, %v1796
    %v1798 = vrot.slane %v1785, %v1797
    %v1799 = vlaneseq
    %v1800 = vshrl.u32 %v1799, 7
    %v1801 = vsub.s32 3, %v1800
    %v1802 = vrot.slane %v1785, %v1801
    %v1803 = vlaneseq
    %v1804 = vshrl.u32 %v1803, 7
    %v1805 = vsub.s32 4, %v1804
    %v1806 = vrot.slane %v1785, %v1805
    %v1807 = vlaneseq
    %v1808 = vshrl.u32 %v1807, 7
    %v1809 = vsub.s32 5, %v1808
    %v1810 = vrot.slane %v1785, %v1809
    %v1811 = vlaneseq
    %v1812 = vshrl.u32 %v1811, 7
    %v1813 = vsub.s32 6, %v1812
    %v1814 = vrot.slane %v1785, %v1813
    %v1815 = vlaneseq
    %v1816 = vshrl.u32 %v1815, 7
    %v1817 = vsub.s32 7, %v1816
    %v1818 = vrot.slane %v1785, %v1817
    %v2083 = vunpack.c.l.b16 %v1529
    %v2084 = vunpack.c.h.b16 %v1529
    %v2085 = vunpack.c.l.b16 %v1530
    %v2086 = vunpack.c.h.b16 %v1530
    %v2087 = vunpack.c.l.b16 %v1531
    %v2088 = vunpack.c.h.b16 %v1531
    %v2089 = vunpack.c.l.b16 %v1532
    %v2090 = vunpack.c.h.b16 %v1532
    %v2091 = vunpack.c.l.b16 %v1533
    %v2092 = vunpack.c.h.b16 %v1533
    %v2093 = vunpack.c.l.b16 %v1534
    %v2094 = vunpack.c.h.b16 %v1534
    %v2095 = vunpack.c.l.b16 %v1535
    %v2096 = vunpack.c.h.b16 %v1535
    %v2097 = vunpack.c.l.b16 %v1536
    %v2098 = vunpack.c.h.b16 %v1536
    %v2099 = vunpack.c.l.b16 %v1537
    %v2100 = vunpack.c.h.b16 %v1537
    %v2101 = vunpack.c.l.b16 %v1538
    %v2102 = vunpack.c.h.b16 %v1538
    %v2103 = vunpack.c.l.b16 %v1539
    %v2104 = vunpack.c.h.b16 %v1539
    %v2105 = vunpack.c.l.b16 %v1540
    %v2106 = vunpack.c.h.b16 %v1540
    %v2107 = vunpack.c.l.b16 %v1541
    %v2108 = vunpack.c.h.b16 %v1541
    %v2109 = vunpack.c.l.b16 %v1542
    %v2110 = vunpack.c.h.b16 %v1542
    %v2111 = vunpack.c.l.b16 %v1543
    %v2112 = vunpack.c.h.b16 %v1543
    %v2113 = vunpack.c.l.b16 %v1544
    %v2114 = vunpack.c.h.b16 %v1544
    %v2115 = vunpack.c.l.b16 %v1545
    %v2116 = vunpack.c.h.b16 %v1545
    %v2117 = vunpack.c.l.b16 %v1546
    %v2118 = vunpack.c.h.b16 %v1546
    %v2119 = vunpack.c.l.b16 %v1547
    %v2120 = vunpack.c.h.b16 %v1547
    %v2121 = vunpack.c.l.b16 %v1548
    %v2122 = vunpack.c.h.b16 %v1548
    %v2123 = vunpack.c.l.b16 %v1549
    %v2124 = vunpack.c.h.b16 %v1549
    %v2125 = vunpack.c.l.b16 %v1550
    %v2126 = vunpack.c.h.b16 %v1550
    %v2127 = vunpack.c.l.b16 %v1551
    %v2128 = vunpack.c.h.b16 %v1551
    %v2129 = vunpack.c.l.b16 %v1552
    %v2130 = vunpack.c.h.b16 %v1552
    %v2131 = vunpack.c.l.b16 %v1553
    %v2132 = vunpack.c.h.b16 %v1553
    %v2133 = vunpack.c.l.b16 %v1554
    %v2134 = vunpack.c.h.b16 %v1554
    %v2135 = vunpack.c.l.b16 %v1555
    %v2136 = vunpack.c.h.b16 %v1555
    %v2137 = vunpack.c.l.b16 %v1556
    %v2138 = vunpack.c.h.b16 %v1556
    %v2139 = vunpack.c.l.b16 %v1557
    %v2140 = vunpack.c.h.b16 %v1557
    %v2141 = vunpack.c.l.b16 %v1558
    %v2142 = vunpack.c.h.b16 %v1558
    %v2143 = vunpack.c.l.b16 %v1559
    %v2144 = vunpack.c.h.b16 %v1559
    %v2145 = vunpack.c.l.b16 %v1560
    %v2146 = vunpack.c.h.b16 %v1560
    %v2147 = vunpack.c.l.b16 %v1561
    %v2148 = vunpack.c.h.b16 %v1561
    %v2149 = vunpack.c.l.b16 %v1562
    %v2150 = vunpack.c.h.b16 %v1562
    %v2151 = vunpack.c.l.b16 %v1563
    %v2152 = vunpack.c.h.b16 %v1563
    %v2153 = vunpack.c.l.b16 %v1564
    %v2154 = vunpack.c.h.b16 %v1564
    %v2155 = vunpack.c.l.b16 %v1565
    %v2156 = vunpack.c.h.b16 %v1565
    %v2157 = vunpack.c.l.b16 %v1566
    %v2158 = vunpack.c.h.b16 %v1566
    %v2159 = vunpack.c.l.b16 %v1567
    %v2160 = vunpack.c.h.b16 %v1567
    %v2161 = vunpack.c.l.b16 %v1568
    %v2162 = vunpack.c.h.b16 %v1568
    %v2163 = vunpack.c.l.b16 %v1569
    %v2164 = vunpack.c.h.b16 %v1569
    %v2165 = vunpack.c.l.b16 %v1570
    %v2166 = vunpack.c.h.b16 %v1570
    %v2167 = vunpack.c.l.b16 %v1571
    %v2168 = vunpack.c.h.b16 %v1571
    %v2169 = vunpack.c.l.b16 %v1572
    %v2170 = vunpack.c.h.b16 %v1572
    %v2171 = vunpack.c.l.b16 %v1573
    %v2172 = vunpack.c.h.b16 %v1573
    %v2173 = vunpack.c.l.b16 %v1574
    %v2174 = vunpack.c.h.b16 %v1574
    %v2175 = vunpack.c.l.b16 %v1575
    %v2176 = vunpack.c.h.b16 %v1575
    %v2177 = vunpack.c.l.b16 %v1576
    %v2178 = vunpack.c.h.b16 %v1576
    %v2179 = vunpack.c.l.b16 %v1577
    %v2180 = vunpack.c.h.b16 %v1577
    %v2181 = vunpack.c.l.b16 %v1578
    %v2182 = vunpack.c.h.b16 %v1578
    %v2183 = vunpack.c.l.b16 %v1579
    %v2184 = vunpack.c.h.b16 %v1579
    %v2185 = vunpack.c.l.b16 %v1580
    %v2186 = vunpack.c.h.b16 %v1580
    %v2187 = vunpack.c.l.b16 %v1581
    %v2188 = vunpack.c.h.b16 %v1581
    %v2189 = vunpack.c.l.b16 %v1582
    %v2190 = vunpack.c.h.b16 %v1582
    %v2191 = vunpack.c.l.b16 %v1583
    %v2192 = vunpack.c.h.b16 %v1583
    %v2193 = vunpack.c.l.b16 %v1584
    %v2194 = vunpack.c.h.b16 %v1584
    %v2195 = vunpack.c.l.b16 %v1585
    %v2196 = vunpack.c.h.b16 %v1585
    %v2197 = vunpack.c.l.b16 %v1586
    %v2198 = vunpack.c.h.b16 %v1586
    %v2199 = vunpack.c.l.b16 %v1587
    %v2200 = vunpack.c.h.b16 %v1587
    %v2201 = vunpack.c.l.b16 %v1588
    %v2202 = vunpack.c.h.b16 %v1588
    %v2203 = vunpack.c.l.b16 %v1589
    %v2204 = vunpack.c.h.b16 %v1589
    %v2205 = vunpack.c.l.b16 %v1590
    %v2206 = vunpack.c.h.b16 %v1590
    %v2207 = vunpack.c.l.b16 %v1591
    %v2208 = vunpack.c.h.b16 %v1591
    %v2209 = vunpack.c.l.b16 %v1592
    %v2210 = vunpack.c.h.b16 %v1592
    %v2211 = vunpack.c.l.b16 %v1593
    %v2212 = vunpack.c.h.b16 %v1593
    %v2213 = vunpack.c.l.b16 %v1594
    %v2214 = vunpack.c.h.b16 %v1594
    %v2215 = vunpack.c.l.b16 %v1595
    %v2216 = vunpack.c.h.b16 %v1595
    %v2217 = vunpack.c.l.b16 %v1596
    %v2218 = vunpack.c.h.b16 %v1596
    %v2219 = vunpack.c.l.b16 %v1597
    %v2220 = vunpack.c.h.b16 %v1597
    %v2221 = vunpack.c.l.b16 %v1598
    %v2222 = vunpack.c.h.b16 %v1598
    %v2223 = vunpack.c.l.b16 %v1599
    %v2224 = vunpack.c.h.b16 %v1599
    %v2225 = vunpack.c.l.b16 %v1600
    %v2226 = vunpack.c.h.b16 %v1600
    %v2227 = vunpack.c.l.b16 %v1601
    %v2228 = vunpack.c.h.b16 %v1601
    %v2229 = vunpack.c.l.b16 %v1602
    %v2230 = vunpack.c.h.b16 %v1602
    %v2231 = vunpack.c.l.b16 %v1603
    %v2232 = vunpack.c.h.b16 %v1603
    %v2233 = vunpack.c.l.b16 %v1604
    %v2234 = vunpack.c.h.b16 %v1604
    %v2235 = vunpack.c.l.b16 %v1605
    %v2236 = vunpack.c.h.b16 %v1605
    %v2237 = vunpack.c.l.b16 %v1606
    %v2238 = vunpack.c.h.b16 %v1606
    %v2239 = vunpack.c.l.b16 %v1607
    %v2240 = vunpack.c.h.b16 %v1607
    %v2241 = vunpack.c.l.b16 %v1608
    %v2242 = vunpack.c.h.b16 %v1608
    %v2243 = vunpack.c.l.b16 %v1609
    %v2244 = vunpack.c.h.b16 %v1609
    %v2245 = vunpack.c.l.b16 %v1610
    %v2246 = vunpack.c.h.b16 %v1610
    %v2247 = vunpack.c.l.b16 %v1611
    %v2248 = vunpack.c.h.b16 %v1611
    %v2249 = vunpack.c.l.b16 %v1612
    %v2250 = vunpack.c.h.b16 %v1612
    %v2251 = vunpack.c.l.b16 %v1613
    %v2252 = vunpack.c.h.b16 %v1613
    %v2253 = vunpack.c.l.b16 %v1614
    %v2254 = vunpack.c.h.b16 %v1614
    %v2255 = vunpack.c.l.b16 %v1615
    %v2256 = vunpack.c.h.b16 %v1615
    %v2257 = vunpack.c.l.b16 %v1616
    %v2258 = vunpack.c.h.b16 %v1616
    %v2259 = vunpack.c.l.b16 %v1617
    %v2260 = vunpack.c.h.b16 %v1617
    %v2261 = vunpack.c.l.b16 %v1618
    %v2262 = vunpack.c.h.b16 %v1618
    %v2263 = vunpack.c.l.b16 %v1619
    %v2264 = vunpack.c.h.b16 %v1619
    %v2265 = vunpack.c.l.b16 %v1620
    %v2266 = vunpack.c.h.b16 %v1620
    %v2267 = vunpack.c.l.b16 %v1621
    %v2268 = vunpack.c.h.b16 %v1621
    %v2269 = vunpack.c.l.b16 %v1622
    %v2270 = vunpack.c.h.b16 %v1622
    %v2271 = vunpack.c.l.b16 %v1623
    %v2272 = vunpack.c.h.b16 %v1623
    %v2273 = vunpack.c.l.b16 %v1624
    %v2274 = vunpack.c.h.b16 %v1624
    %v2275 = vunpack.c.l.b16 %v1625
    %v2276 = vunpack.c.h.b16 %v1625
    %v2277 = vunpack.c.l.b16 %v1626
    %v2278 = vunpack.c.h.b16 %v1626
    %v2279 = vunpack.c.l.b16 %v1627
    %v2280 = vunpack.c.h.b16 %v1627
    %v2281 = vunpack.c.l.b16 %v1628
    %v2282 = vunpack.c.h.b16 %v1628
    %v2283 = vunpack.c.l.b16 %v1629
    %v2284 = vunpack.c.h.b16 %v1629
    %v2285 = vunpack.c.l.b16 %v1630
    %v2286 = vunpack.c.h.b16 %v1630
    %v2287 = vunpack.c.l.b16 %v1631
    %v2288 = vunpack.c.h.b16 %v1631
    %v2289 = vunpack.c.l.b16 %v1632
    %v2290 = vunpack.c.h.b16 %v1632
    %v2291 = vunpack.c.l.b16 %v1633
    %v2292 = vunpack.c.h.b16 %v1633
    %v2293 = vunpack.c.l.b16 %v1634
    %v2294 = vunpack.c.h.b16 %v1634
    %v2295 = vunpack.c.l.b16 %v1635
    %v2296 = vunpack.c.h.b16 %v1635
    %v2297 = vunpack.c.l.b16 %v1636
    %v2298 = vunpack.c.h.b16 %v1636
    %v2299 = vunpack.c.l.b16 %v1637
    %v2300 = vunpack.c.h.b16 %v1637
    %v2301 = vunpack.c.l.b16 %v1638
    %v2302 = vunpack.c.h.b16 %v1638
    %v2303 = vunpack.c.l.b16 %v1639
    %v2304 = vunpack.c.h.b16 %v1639
    %v2305 = vunpack.c.l.b16 %v1640
    %v2306 = vunpack.c.h.b16 %v1640
    %v2307 = vunpack.c.l.b16 %v1641
    %v2308 = vunpack.c.h.b16 %v1641
    %v2309 = vunpack.c.l.b16 %v1642
    %v2310 = vunpack.c.h.b16 %v1642
    %v2311 = vunpack.c.l.b16 %v1643
    %v2312 = vunpack.c.h.b16 %v1643
    %v2313 = vunpack.c.l.b16 %v1644
    %v2314 = vunpack.c.h.b16 %v1644
    %v2315 = vunpack.c.l.b16 %v1645
    %v2316 = vunpack.c.h.b16 %v1645
    %v2317 = vunpack.c.l.b16 %v1646
    %v2318 = vunpack.c.h.b16 %v1646
    %v2319 = vunpack.c.l.b16 %v1647
    %v2320 = vunpack.c.h.b16 %v1647
    %v2321 = vunpack.c.l.b16 %v1648
    %v2322 = vunpack.c.h.b16 %v1648
    %v2323 = vunpack.c.l.b16 %v1649
    %v2324 = vunpack.c.h.b16 %v1649
    %v2325 = vunpack.c.l.b16 %v1650
    %v2326 = vunpack.c.h.b16 %v1650
    %v2327 = vunpack.c.l.b16 %v1651
    %v2328 = vunpack.c.h.b16 %v1651
    %v2329 = vunpack.c.l.b16 %v1652
    %v2330 = vunpack.c.h.b16 %v1652
    %v2331 = vunpack.c.l.b16 %v1653
    %v2332 = vunpack.c.h.b16 %v1653
    %v2333 = vunpack.c.l.b16 %v1654
    %v2334 = vunpack.c.h.b16 %v1654
    %v2335 = vunpack.c.l.b16 %v1655
    %v2336 = vunpack.c.h.b16 %v1655
    %v2337 = vunpack.c.l.b16 %v1656
    %v2338 = vunpack.c.h.b16 %v1656
    %v2339 = vunpack.c.l.b16 %v1657
    %v2340 = vunpack.c.h.b16 %v1657
    %v2341 = vunpack.c.l.b16 %v1658
    %v2342 = vunpack.c.h.b16 %v1658
    %v2343 = vunpack.c.l.b16 %v1659
    %v2344 = vunpack.c.h.b16 %v1659
    %v2345 = vunpack.c.l.b16 %v1660
    %v2346 = vunpack.c.h.b16 %v1660
    %v2347 = vunpack.c.l.b16 %v1661
    %v2348 = vunpack.c.h.b16 %v1661
    %v2349 = vunpack.c.l.b16 %v1662
    %v2350 = vunpack.c.h.b16 %v1662
    %v2351 = vunpack.c.l.b16 %v1663
    %v2352 = vunpack.c.h.b16 %v1663
    %v2353 = vunpack.c.l.b16 %v1664
    %v2354 = vunpack.c.h.b16 %v1664
    %v2355 = vunpack.c.l.b16 %v1665
    %v2356 = vunpack.c.h.b16 %v1665
    %v2357 = vunpack.c.l.b16 %v1666
    %v2358 = vunpack.c.h.b16 %v1666
    %v2359 = vunpack.c.l.b16 %v1667
    %v2360 = vunpack.c.h.b16 %v1667
    %v2361 = vunpack.c.l.b16 %v1668
    %v2362 = vunpack.c.h.b16 %v1668
    %v2363 = vunpack.c.l.b16 %v1669
    %v2364 = vunpack.c.h.b16 %v1669
    %v2365 = vunpack.c.l.b16 %v1670
    %v2366 = vunpack.c.h.b16 %v1670
    %v2367 = vunpack.c.l.b16 %v1671
    %v2368 = vunpack.c.h.b16 %v1671
    %v2369 = vunpack.c.l.b16 %v1672
    %v2370 = vunpack.c.h.b16 %v1672
    %v2371 = vunpack.c.l.b16 %v1673
    %v2372 = vunpack.c.h.b16 %v1673
    %v2373 = vunpack.c.l.b16 %v1674
    %v2374 = vunpack.c.h.b16 %v1674
    %v2375 = vunpack.c.l.b16 %v1675
    %v2376 = vunpack.c.h.b16 %v1675
    %v2377 = vunpack.c.l.b16 %v1676
    %v2378 = vunpack.c.h.b16 %v1676
    %v2379 = vunpack.c.l.b16 %v1677
    %v2380 = vunpack.c.h.b16 %v1677
    %v2381 = vunpack.c.l.b16 %v1678
    %v2382 = vunpack.c.h.b16 %v1678
    %v2383 = vunpack.c.l.b16 %v1679
    %v2384 = vunpack.c.h.b16 %v1679
    %v2385 = vunpack.c.l.b16 %v1680
    %v2386 = vunpack.c.h.b16 %v1680
    %v2387 = vunpack.c.l.b16 %v1681
    %v2388 = vunpack.c.h.b16 %v1681
    %v2389 = vunpack.c.l.b16 %v1682
    %v2390 = vunpack.c.h.b16 %v1682
    %v2391 = vunpack.c.l.b16 %v1683
    %v2392 = vunpack.c.h.b16 %v1683
    %v2393 = vunpack.c.l.b16 %v1684
    %v2394 = vunpack.c.h.b16 %v1684
    %v2395 = vunpack.c.l.b16 %v1685
    %v2396 = vunpack.c.h.b16 %v1685
    %v2397 = vunpack.c.l.b16 %v1686
    %v2398 = vunpack.c.h.b16 %v1686
    %v2399 = vunpack.c.l.b16 %v1687
    %v2400 = vunpack.c.h.b16 %v1687
    %v2401 = vunpack.c.l.b16 %v1688
    %v2402 = vunpack.c.h.b16 %v1688
    %v2403 = vunpack.c.l.b16 %v1689
    %v2404 = vunpack.c.h.b16 %v1689
    %v2405 = vunpack.c.l.b16 %v1690
    %v2406 = vunpack.c.h.b16 %v1690
    %v2407 = vunpack.c.l.b16 %v1691
    %v2408 = vunpack.c.h.b16 %v1691
    %v2409 = vunpack.c.l.b16 %v1692
    %v2410 = vunpack.c.h.b16 %v1692
    %v2411 = vunpack.c.l.b16 %v1693
    %v2412 = vunpack.c.h.b16 %v1693
    %v2413 = vunpack.c.l.b16 %v1694
    %v2414 = vunpack.c.h.b16 %v1694
    %v2415 = vunpack.c.l.b16 %v1695
    %v2416 = vunpack.c.h.b16 %v1695
    %v2417 = vunpack.c.l.b16 %v1696
    %v2418 = vunpack.c.h.b16 %v1696
    %v2419 = vunpack.c.l.b16 %v1697
    %v2420 = vunpack.c.h.b16 %v1697
    %v2421 = vunpack.c.l.b16 %v1698
    %v2422 = vunpack.c.h.b16 %v1698
    %v2423 = vunpack.c.l.b16 %v1699
    %v2424 = vunpack.c.h.b16 %v1699
    %v2425 = vunpack.c.l.b16 %v1700
    %v2426 = vunpack.c.h.b16 %v1700
    %v2427 = vunpack.c.l.b16 %v1701
    %v2428 = vunpack.c.h.b16 %v1701
    %v2429 = vunpack.c.l.b16 %v1702
    %v2430 = vunpack.c.h.b16 %v1702
    %v2431 = vunpack.c.l.b16 %v1703
    %v2432 = vunpack.c.h.b16 %v1703
    %v2433 = vunpack.c.l.b16 %v1704
    %v2434 = vunpack.c.h.b16 %v1704
    %v2435 = vunpack.c.l.b16 %v1705
    %v2436 = vunpack.c.h.b16 %v1705
    %v2437 = vunpack.c.l.b16 %v1706
    %v2438 = vunpack.c.h.b16 %v1706
    %v2439 = vunpack.c.l.b16 %v1707
    %v2440 = vunpack.c.h.b16 %v1707
    %v2441 = vunpack.c.l.b16 %v1708
    %v2442 = vunpack.c.h.b16 %v1708
    %v2443 = vunpack.c.l.b16 %v1709
    %v2444 = vunpack.c.h.b16 %v1709
    %v2445 = vunpack.c.l.b16 %v1710
    %v2446 = vunpack.c.h.b16 %v1710
    %v2447 = vunpack.c.l.b16 %v1711
    %v2448 = vunpack.c.h.b16 %v1711
    %v2449 = vunpack.c.l.b16 %v1712
    %v2450 = vunpack.c.h.b16 %v1712
    %v2451 = vunpack.c.l.b16 %v1713
    %v2452 = vunpack.c.h.b16 %v1713
    %v2453 = vunpack.c.l.b16 %v1714
    %v2454 = vunpack.c.h.b16 %v1714
    %v2455 = vunpack.c.l.b16 %v1715
    %v2456 = vunpack.c.h.b16 %v1715
    %v2457 = vunpack.c.l.b16 %v1716
    %v2458 = vunpack.c.h.b16 %v1716
    %v2459 = vunpack.c.l.b16 %v1717
    %v2460 = vunpack.c.h.b16 %v1717
    %v2461 = vunpack.c.l.b16 %v1718
    %v2462 = vunpack.c.h.b16 %v1718
    %v2463 = vunpack.c.l.b16 %v1719
    %v2464 = vunpack.c.h.b16 %v1719
    %v2465 = vunpack.c.l.b16 %v1720
    %v2466 = vunpack.c.h.b16 %v1720
    %v2467 = vunpack.c.l.b16 %v1721
    %v2468 = vunpack.c.h.b16 %v1721
    %v2469 = vunpack.c.l.b16 %v1722
    %v2470 = vunpack.c.h.b16 %v1722
    %v2471 = vunpack.c.l.b16 %v1723
    %v2472 = vunpack.c.h.b16 %v1723
    %v2473 = vunpack.c.l.b16 %v1724
    %v2474 = vunpack.c.h.b16 %v1724
    %v2475 = vunpack.c.l.b16 %v1725
    %v2476 = vunpack.c.h.b16 %v1725
    %v2477 = vunpack.c.l.b16 %v1726
    %v2478 = vunpack.c.h.b16 %v1726
    %v2479 = vunpack.c.l.b16 %v1727
    %v2480 = vunpack.c.h.b16 %v1727
    %v2481 = vunpack.c.l.b16 %v1728
    %v2482 = vunpack.c.h.b16 %v1728
    %v2483 = vunpack.c.l.b16 %v1729
    %v2484 = vunpack.c.h.b16 %v1729
    %v2485 = vunpack.c.l.b16 %v1730
    %v2486 = vunpack.c.h.b16 %v1730
    %v2487 = vunpack.c.l.b16 %v1731
    %v2488 = vunpack.c.h.b16 %v1731
    %v2489 = vunpack.c.l.b16 %v1732
    %v2490 = vunpack.c.h.b16 %v1732
    %v2491 = vunpack.c.l.b16 %v1733
    %v2492 = vunpack.c.h.b16 %v1733
    %v2493 = vunpack.c.l.b16 %v1734
    %v2494 = vunpack.c.h.b16 %v1734
    %v2495 = vunpack.c.l.b16 %v1735
    %v2496 = vunpack.c.h.b16 %v1735
    %v2497 = vunpack.c.l.b16 %v1736
    %v2498 = vunpack.c.h.b16 %v1736
    %v2499 = vunpack.c.l.b16 %v1737
    %v2500 = vunpack.c.h.b16 %v1737
    %v2501 = vunpack.c.l.b16 %v1738
    %v2502 = vunpack.c.h.b16 %v1738
    %v2503 = vunpack.c.l.b16 %v1739
    %v2504 = vunpack.c.h.b16 %v1739
    %v2505 = vunpack.c.l.b16 %v1740
    %v2506 = vunpack.c.h.b16 %v1740
    %v2507 = vunpack.c.l.b16 %v1741
    %v2508 = vunpack.c.h.b16 %v1741
    %v2509 = vunpack.c.l.b16 %v1742
    %v2510 = vunpack.c.h.b16 %v1742
    %v2511 = vunpack.c.l.b16 %v1743
    %v2512 = vunpack.c.h.b16 %v1743
    %v2513 = vunpack.c.l.b16 %v1744
    %v2514 = vunpack.c.h.b16 %v1744
    %v2515 = vunpack.c.l.b16 %v1745
    %v2516 = vunpack.c.h.b16 %v1745
    %v2517 = vunpack.c.l.b16 %v1746
    %v2518 = vunpack.c.h.b16 %v1746
    %v2519 = vunpack.c.l.b16 %v1747
    %v2520 = vunpack.c.h.b16 %v1747
    %v2521 = vunpack.c.l.b16 %v1748
    %v2522 = vunpack.c.h.b16 %v1748
    %v2523 = vunpack.c.l.b16 %v1749
    %v2524 = vunpack.c.h.b16 %v1749
    %v2525 = vunpack.c.l.b16 %v1750
    %v2526 = vunpack.c.h.b16 %v1750
    %v2527 = vunpack.c.l.b16 %v1751
    %v2528 = vunpack.c.h.b16 %v1751
    %v2529 = vunpack.c.l.b16 %v1752
    %v2530 = vunpack.c.h.b16 %v1752
    %v2531 = vunpack.c.l.b16 %v1753
    %v2532 = vunpack.c.h.b16 %v1753
    %v2533 = vunpack.c.l.b16 %v1754
    %v2534 = vunpack.c.h.b16 %v1754
    %v2535 = vunpack.c.l.b16 %v1755
    %v2536 = vunpack.c.h.b16 %v1755
    %v2537 = vunpack.c.l.b16 %v1756
    %v2538 = vunpack.c.h.b16 %v1756
    %v2539 = vunpack.c.l.b16 %v1757
    %v2540 = vunpack.c.h.b16 %v1757
    %v2541 = vunpack.c.l.b16 %v1758
    %v2542 = vunpack.c.h.b16 %v1758
    %v2543 = vunpack.c.l.b16 %v1759
    %v2544 = vunpack.c.h.b16 %v1759
    %v2545 = vunpack.c.l.b16 %v1760
    %v2546 = vunpack.c.h.b16 %v1760
    %v2547 = vunpack.c.l.b16 %v1761
    %v2548 = vunpack.c.h.b16 %v1761
    %v2549 = vunpack.c.l.b16 %v1762
    %v2550 = vunpack.c.h.b16 %v1762
    %v2551 = vunpack.c.l.b16 %v1763
    %v2552 = vunpack.c.h.b16 %v1763
    %v2553 = vunpack.c.l.b16 %v1764
    %v2554 = vunpack.c.h.b16 %v1764
    %v2555 = vunpack.c.l.b16 %v1765
    %v2556 = vunpack.c.h.b16 %v1765
    %v2557 = vunpack.c.l.b16 %v1766
    %v2558 = vunpack.c.h.b16 %v1766
    %v2559 = vunpack.c.l.b16 %v1767
    %v2560 = vunpack.c.h.b16 %v1767
    %v2561 = vunpack.c.l.b16 %v1768
    %v2562 = vunpack.c.h.b16 %v1768
    %v2563 = vunpack.c.l.b16 %v1769
    %v2564 = vunpack.c.h.b16 %v1769
    %v2565 = vunpack.c.l.b16 %v1770
    %v2566 = vunpack.c.h.b16 %v1770
    %v2567 = vunpack.c.l.b16 %v1771
    %v2568 = vunpack.c.h.b16 %v1771
    %v2569 = vunpack.c.l.b16 %v1772
    %v2570 = vunpack.c.h.b16 %v1772
    %v2571 = vunpack.c.l.b16 %v1773
    %v2572 = vunpack.c.h.b16 %v1773
    %v2573 = vunpack.c.l.b16 %v1774
    %v2574 = vunpack.c.h.b16 %v1774
    %v2575 = vunpack.c.l.b16 %v1775
    %v2576 = vunpack.c.h.b16 %v1775
    %v2577 = vunpack.c.l.b16 %v1776
    %v2578 = vunpack.c.h.b16 %v1776
    %v2579 = vunpack.c.l.b16 %v1777
    %v2580 = vunpack.c.h.b16 %v1777
    %v2581 = vunpack.c.l.b16 %v1778
    %v2582 = vunpack.c.h.b16 %v1778
    %v2583 = vunpack.c.l.b16 %v1779
    %v2584 = vunpack.c.h.b16 %v1779
    %v2585 = vunpack.c.l.b16 %v1780
    %v2586 = vunpack.c.h.b16 %v1780
    %v2587 = vunpack.c.l.b16 %v1781
    %v2588 = vunpack.c.h.b16 %v1781
    %v2589 = vunpack.c.l.b16 %v1782
    %v2590 = vunpack.c.h.b16 %v1782
    %v2591 = vunpack.c.l.b16 %v1783
    %v2592 = vunpack.c.h.b16 %v1783
    %v2593 = vunpack.c.l.b16 %v1784
    %v2594 = vunpack.c.h.b16 %v1784
    %v2595 = vpack.c.b16 %v2091, %v2083
    %v2596 = vpack.c.b16 %v2092, %v2084
    %v2597 = vpack.c.b16 %v2093, %v2085
    %v2598 = vpack.c.b16 %v2094, %v2086
    %v2599 = vpack.c.b16 %v2095, %v2087
    %v2600 = vpack.c.b16 %v2096, %v2088
    %v2601 = vpack.c.b16 %v2097, %v2089
    %v2602 = vpack.c.b16 %v2098, %v2090
    %v2603 = vpack.c.b16 %v2107, %v2099
    %v2604 = vpack.c.b16 %v2108, %v2100
    %v2605 = vpack.c.b16 %v2109, %v2101
    %v2606 = vpack.c.b16 %v2110, %v2102
    %v2607 = vpack.c.b16 %v2111, %v2103
    %v2608 = vpack.c.b16 %v2112, %v2104
    %v2609 = vpack.c.b16 %v2113, %v2105
    %v2610 = vpack.c.b16 %v2114, %v2106
    %v2611 = vpack.c.b16 %v2123, %v2115
    %v2612 = vpack.c.b16 %v2124, %v2116
    %v2613 = vpack.c.b16 %v2125, %v2117
    %v2614 = vpack.c.b16 %v2126, %v2118
    %v2615 = vpack.c.b16 %v2127, %v2119
    %v2616 = vpack.c.b16 %v2128, %v2120
    %v2617 = vpack.c.b16 %v2129, %v2121
    %v2618 = vpack.c.b16 %v2130, %v2122
    %v2619 = vpack.c.b16 %v2139, %v2131
    %v2620 = vpack.c.b16 %v2140, %v2132
    %v2621 = vpack.c.b16 %v2141, %v2133
    %v2622 = vpack.c.b16 %v2142, %v2134
    %v2623 = vpack.c.b16 %v2143, %v2135
    %v2624 = vpack.c.b16 %v2144, %v2136
    %v2625 = vpack.c.b16 %v2145, %v2137
    %v2626 = vpack.c.b16 %v2146, %v2138
    %v2627 = vpack.c.b16 %v2155, %v2147
    %v2628 = vpack.c.b16 %v2156, %v2148
    %v2629 = vpack.c.b16 %v2157, %v2149
    %v2630 = vpack.c.b16 %v2158, %v2150
    %v2631 = vpack.c.b16 %v2159, %v2151
    %v2632 = vpack.c.b16 %v2160, %v2152
    %v2633 = vpack.c.b16 %v2161, %v2153
    %v2634 = vpack.c.b16 %v2162, %v2154
    %v2635 = vpack.c.b16 %v2171, %v2163
    %v2636 = vpack.c.b16 %v2172, %v2164
    %v2637 = vpack.c.b16 %v2173, %v2165
    %v2638 = vpack.c.b16 %v2174, %v2166
    %v2639 = vpack.c.b16 %v2175, %v2167
    %v2640 = vpack.c.b16 %v2176, %v2168
    %v2641 = vpack.c.b16 %v2177, %v2169
    %v2642 = vpack.c.b16 %v2178, %v2170
    %v2643 = vpack.c.b16 %v2187, %v2179
    %v2644 = vpack.c.b16 %v2188, %v2180
    %v2645 = vpack.c.b16 %v2189, %v2181
    %v2646 = vpack.c.b16 %v2190, %v2182
    %v2647 = vpack.c.b16 %v2191, %v2183
    %v2648 = vpack.c.b16 %v2192, %v2184
    %v2649 = vpack.c.b16 %v2193, %v2185
    %v2650 = vpack.c.b16 %v2194, %v2186
    %v2651 = vpack.c.b16 %v2203, %v2195
    %v2652 = vpack.c.b16 %v2204, %v2196
    %v2653 = vpack.c.b16 %v2205, %v2197
    %v2654 = vpack.c.b16 %v2206, %v2198
    %v2655 = vpack.c.b16 %v2207, %v2199
    %v2656 = vpack.c.b16 %v2208, %v2200
    %v2657 = vpack.c.b16 %v2209, %v2201
    %v2658 = vpack.c.b16 %v2210, %v2202
    %v2659 = vpack.c.b16 %v2219, %v2211
    %v2660 = vpack.c.b16 %v2220, %v2212
    %v2661 = vpack.c.b16 %v2221, %v2213
    %v2662 = vpack.c.b16 %v2222, %v2214
    %v2663 = vpack.c.b16 %v2223, %v2215
    %v2664 = vpack.c.b16 %v2224, %v2216
    %v2665 = vpack.c.b16 %v2225, %v2217
    %v2666 = vpack.c.b16 %v2226, %v2218
    %v2667 = vpack.c.b16 %v2235, %v2227
    %v2668 = vpack.c.b16 %v2236, %v2228
    %v2669 = vpack.c.b16 %v2237, %v2229
    %v2670 = vpack.c.b16 %v2238, %v2230
    %v2671 = vpack.c.b16 %v2239, %v2231
    %v2672 = vpack.c.b16 %v2240, %v2232
    %v2673 = vpack.c.b16 %v2241, %v2233
    %v2674 = vpack.c.b16 %v2242, %v2234
    %v2675 = vpack.c.b16 %v2251, %v2243
    %v2676 = vpack.c.b16 %v2252, %v2244
    %v2677 = vpack.c.b16 %v2253, %v2245
    %v2678 = vpack.c.b16 %v2254, %v2246
    %v2679 = vpack.c.b16 %v2255, %v2247
    %v2680 = vpack.c.b16 %v2256, %v2248
    %v2681 = vpack.c.b16 %v2257, %v2249
    %v2682 = vpack.c.b16 %v2258, %v2250
    %v2683 = vpack.c.b16 %v2267, %v2259
    %v2684 = vpack.c.b16 %v2268, %v2260
    %v2685 = vpack.c.b16 %v2269, %v2261
    %v2686 = vpack.c.b16 %v2270, %v2262
    %v2687 = vpack.c.b16 %v2271, %v2263
    %v2688 = vpack.c.b16 %v2272, %v2264
    %v2689 = vpack.c.b16 %v2273, %v2265
    %v2690 = vpack.c.b16 %v2274, %v2266
    %v2691 = vpack.c.b16 %v2283, %v2275
    %v2692 = vpack.c.b16 %v2284, %v2276
    %v2693 = vpack.c.b16 %v2285, %v2277
    %v2694 = vpack.c.b16 %v2286, %v2278
    %v2695 = vpack.c.b16 %v2287, %v2279
    %v2696 = vpack.c.b16 %v2288, %v2280
    %v2697 = vpack.c.b16 %v2289, %v2281
    %v2698 = vpack.c.b16 %v2290, %v2282
    %v2699 = vpack.c.b16 %v2299, %v2291
    %v2700 = vpack.c.b16 %v2300, %v2292
    %v2701 = vpack.c.b16 %v2301, %v2293
    %v2702 = vpack.c.b16 %v2302, %v2294
    %v2703 = vpack.c.b16 %v2303, %v2295
    %v2704 = vpack.c.b16 %v2304, %v2296
    %v2705 = vpack.c.b16 %v2305, %v2297
    %v2706 = vpack.c.b16 %v2306, %v2298
    %v2707 = vpack.c.b16 %v2315, %v2307
    %v2708 = vpack.c.b16 %v2316, %v2308
    %v2709 = vpack.c.b16 %v2317, %v2309
    %v2710 = vpack.c.b16 %v2318, %v2310
    %v2711 = vpack.c.b16 %v2319, %v2311
    %v2712 = vpack.c.b16 %v2320, %v2312
    %v2713 = vpack.c.b16 %v2321, %v2313
    %v2714 = vpack.c.b16 %v2322, %v2314
    %v2715 = vpack.c.b16 %v2331, %v2323
    %v2716 = vpack.c.b16 %v2332, %v2324
    %v2717 = vpack.c.b16 %v2333, %v2325
    %v2718 = vpack.c.b16 %v2334, %v2326
    %v2719 = vpack.c.b16 %v2335, %v2327
    %v2720 = vpack.c.b16 %v2336, %v2328
    %v2721 = vpack.c.b16 %v2337, %v2329
    %v2722 = vpack.c.b16 %v2338, %v2330
    %v2723 = vpack.c.b16 %v2347, %v2339
    %v2724 = vpack.c.b16 %v2348, %v2340
    %v2725 = vpack.c.b16 %v2349, %v2341
    %v2726 = vpack.c.b16 %v2350, %v2342
    %v2727 = vpack.c.b16 %v2351, %v2343
    %v2728 = vpack.c.b16 %v2352, %v2344
    %v2729 = vpack.c.b16 %v2353, %v2345
    %v2730 = vpack.c.b16 %v2354, %v2346
    %v2731 = vpack.c.b16 %v2363, %v2355
    %v2732 = vpack.c.b16 %v2364, %v2356
    %v2733 = vpack.c.b16 %v2365, %v2357
    %v2734 = vpack.c.b16 %v2366, %v2358
    %v2735 = vpack.c.b16 %v2367, %v2359
    %v2736 = vpack.c.b16 %v2368, %v2360
    %v2737 = vpack.c.b16 %v2369, %v2361
    %v2738 = vpack.c.b16 %v2370, %v2362
    %v2739 = vpack.c.b16 %v2379, %v2371
    %v2740 = vpack.c.b16 %v2380, %v2372
    %v2741 = vpack.c.b16 %v2381, %v2373
    %v2742 = vpack.c.b16 %v2382, %v2374
    %v2743 = vpack.c.b16 %v2383, %v2375
    %v2744 = vpack.c.b16 %v2384, %v2376
    %v2745 = vpack.c.b16 %v2385, %v2377
    %v2746 = vpack.c.b16 %v2386, %v2378
    %v2747 = vpack.c.b16 %v2395, %v2387
    %v2748 = vpack.c.b16 %v2396, %v2388
    %v2749 = vpack.c.b16 %v2397, %v2389
    %v2750 = vpack.c.b16 %v2398, %v2390
    %v2751 = vpack.c.b16 %v2399, %v2391
    %v2752 = vpack.c.b16 %v2400, %v2392
    %v2753 = vpack.c.b16 %v2401, %v2393
    %v2754 = vpack.c.b16 %v2402, %v2394
    %v2755 = vpack.c.b16 %v2411, %v2403
    %v2756 = vpack.c.b16 %v2412, %v2404
    %v2757 = vpack.c.b16 %v2413, %v2405
    %v2758 = vpack.c.b16 %v2414, %v2406
    %v2759 = vpack.c.b16 %v2415, %v2407
    %v2760 = vpack.c.b16 %v2416, %v2408
    %v2761 = vpack.c.b16 %v2417, %v2409
    %v2762 = vpack.c.b16 %v2418, %v2410
    %v2763 = vpack.c.b16 %v2427, %v2419
    %v2764 = vpack.c.b16 %v2428, %v2420
    %v2765 = vpack.c.b16 %v2429, %v2421
    %v2766 = vpack.c.b16 %v2430, %v2422
    %v2767 = vpack.c.b16 %v2431, %v2423
    %v2768 = vpack.c.b16 %v2432, %v2424
    %v2769 = vpack.c.b16 %v2433, %v2425
    %v2770 = vpack.c.b16 %v2434, %v2426
    %v2771 = vpack.c.b16 %v2443, %v2435
    %v2772 = vpack.c.b16 %v2444, %v2436
    %v2773 = vpack.c.b16 %v2445, %v2437
    %v2774 = vpack.c.b16 %v2446, %v2438
    %v2775 = vpack.c.b16 %v2447, %v2439
    %v2776 = vpack.c.b16 %v2448, %v2440
    %v2777 = vpack.c.b16 %v2449, %v2441
    %v2778 = vpack.c.b16 %v2450, %v2442
    %v2779 = vpack.c.b16 %v2459, %v2451
    %v2780 = vpack.c.b16 %v2460, %v2452
    %v2781 = vpack.c.b16 %v2461, %v2453
    %v2782 = vpack.c.b16 %v2462, %v2454
    %v2783 = vpack.c.b16 %v2463, %v2455
    %v2784 = vpack.c.b16 %v2464, %v2456
    %v2785 = vpack.c.b16 %v2465, %v2457
    %v2786 = vpack.c.b16 %v2466, %v2458
    %v2787 = vpack.c.b16 %v2475, %v2467
    %v2788 = vpack.c.b16 %v2476, %v2468
    %v2789 = vpack.c.b16 %v2477, %v2469
    %v2790 = vpack.c.b16 %v2478, %v2470
    %v2791 = vpack.c.b16 %v2479, %v2471
    %v2792 = vpack.c.b16 %v2480, %v2472
    %v2793 = vpack.c.b16 %v2481, %v2473
    %v2794 = vpack.c.b16 %v2482, %v2474
    %v2795 = vpack.c.b16 %v2491, %v2483
    %v2796 = vpack.c.b16 %v2492, %v2484
    %v2797 = vpack.c.b16 %v2493, %v2485
    %v2798 = vpack.c.b16 %v2494, %v2486
    %v2799 = vpack.c.b16 %v2495, %v2487
    %v2800 = vpack.c.b16 %v2496, %v2488
    %v2801 = vpack.c.b16 %v2497, %v2489
    %v2802 = vpack.c.b16 %v2498, %v2490
    %v2803 = vpack.c.b16 %v2507, %v2499
    %v2804 = vpack.c.b16 %v2508, %v2500
    %v2805 = vpack.c.b16 %v2509, %v2501
    %v2806 = vpack.c.b16 %v2510, %v2502
    %v2807 = vpack.c.b16 %v2511, %v2503
    %v2808 = vpack.c.b16 %v2512, %v2504
    %v2809 = vpack.c.b16 %v2513, %v2505
    %v2810 = vpack.c.b16 %v2514, %v2506
    %v2811 = vpack.c.b16 %v2523, %v2515
    %v2812 = vpack.c.b16 %v2524, %v2516
    %v2813 = vpack.c.b16 %v2525, %v2517
    %v2814 = vpack.c.b16 %v2526, %v2518
    %v2815 = vpack.c.b16 %v2527, %v2519
    %v2816 = vpack.c.b16 %v2528, %v2520
    %v2817 = vpack.c.b16 %v2529, %v2521
    %v2818 = vpack.c.b16 %v2530, %v2522
    %v2819 = vpack.c.b16 %v2539, %v2531
    %v2820 = vpack.c.b16 %v2540, %v2532
    %v2821 = vpack.c.b16 %v2541, %v2533
    %v2822 = vpack.c.b16 %v2542, %v2534
    %v2823 = vpack.c.b16 %v2543, %v2535
    %v2824 = vpack.c.b16 %v2544, %v2536
    %v2825 = vpack.c.b16 %v2545, %v2537
    %v2826 = vpack.c.b16 %v2546, %v2538
    %v2827 = vpack.c.b16 %v2555, %v2547
    %v2828 = vpack.c.b16 %v2556, %v2548
    %v2829 = vpack.c.b16 %v2557, %v2549
    %v2830 = vpack.c.b16 %v2558, %v2550
    %v2831 = vpack.c.b16 %v2559, %v2551
    %v2832 = vpack.c.b16 %v2560, %v2552
    %v2833 = vpack.c.b16 %v2561, %v2553
    %v2834 = vpack.c.b16 %v2562, %v2554
    %v2835 = vpack.c.b16 %v2571, %v2563
    %v2836 = vpack.c.b16 %v2572, %v2564
    %v2837 = vpack.c.b16 %v2573, %v2565
    %v2838 = vpack.c.b16 %v2574, %v2566
    %v2839 = vpack.c.b16 %v2575, %v2567
    %v2840 = vpack.c.b16 %v2576, %v2568
    %v2841 = vpack.c.b16 %v2577, %v2569
    %v2842 = vpack.c.b16 %v2578, %v2570
    %v2843 = vpack.c.b16 %v2587, %v2579
    %v2844 = vpack.c.b16 %v2588, %v2580
    %v2845 = vpack.c.b16 %v2589, %v2581
    %v2846 = vpack.c.b16 %v2590, %v2582
    %v2847 = vpack.c.b16 %v2591, %v2583
    %v2848 = vpack.c.b16 %v2592, %v2584
    %v2849 = vpack.c.b16 %v2593, %v2585
    %v2850 = vpack.c.b16 %v2594, %v2586
    %3107 = vmatprep.subr.bf16.mxu0 %v2596
    %3108 = vmatpush1.bf16.msra.mxu0 %v2595
    %3109 = vmatprep.subr.bf16.mxu0 %v2604
    %3110 = vmatpush1.bf16.msra.mxu0 %v2603
    %3111 = vmatprep.subr.bf16.mxu0 %v2612
    %3112 = vmatpush1.bf16.msra.mxu0 %v2611
    %3113 = vmatprep.subr.bf16.mxu0 %v2620
    %3114 = vmatpush1.bf16.msra.mxu0 %v2619
    %3115 = vmatprep.subr.bf16.mxu0 %v2628
    %3116 = vmatpush1.bf16.msra.mxu0 %v2627
    %3117 = vmatprep.subr.bf16.mxu0 %v2636
    %3118 = vmatpush1.bf16.msra.mxu0 %v2635
    %3119 = vmatprep.subr.bf16.mxu0 %v2644
    %3120 = vmatpush1.bf16.msra.mxu0 %v2643
    %3121 = vmatprep.subr.bf16.mxu0 %v2652
    %3122 = vmatpush1.bf16.msra.mxu0 %v2651
    %3123 = vmatprep.subr.bf16.mxu0 %v2660
    %3124 = vmatpush1.bf16.msra.mxu0 %v2659
    %3125 = vmatprep.subr.bf16.mxu0 %v2668
    %3126 = vmatpush1.bf16.msra.mxu0 %v2667
    %3127 = vmatprep.subr.bf16.mxu0 %v2676
    %3128 = vmatpush1.bf16.msra.mxu0 %v2675
    %3129 = vmatprep.subr.bf16.mxu0 %v2684
    %3130 = vmatpush1.bf16.msra.mxu0 %v2683
    %3131 = vmatprep.subr.bf16.mxu0 %v2692
    %3132 = vmatpush1.bf16.msra.mxu0 %v2691
    %3133 = vmatprep.subr.bf16.mxu0 %v2700
    %3134 = vmatpush1.bf16.msra.mxu0 %v2699
    %3135 = vmatprep.subr.bf16.mxu0 %v2708
    %3136 = vmatpush1.bf16.msra.mxu0 %v2707
    %3137 = vmatprep.subr.bf16.mxu0 %v2716
    %3138 = vmatpush1.bf16.msra.mxu0 %v2715
    %3139 = vmatprep.mubr.bf16.mxu0 %v1526
    %3140 = vmatmul.mubr.bf16.gmra.mrb[0].mxu0 %v1525
    %v3141 = vpop.f32.mrb[0].mxu0
    %v3142 = vadd.f32 %v1790, %v3141
    %v3143 = vpop.f32.mrb[0].mxu0
    %v3144 = vadd.f32 %v1794, %v3143
    %v3145 = vpop.f32.mrb[0].mxu0
    %v3146 = vpop.f32.mrb[0].mxu0
    %3147 = vdwg.mxu0
    %3148 = vmatprep.subr.bf16.mxu0 %v2724
    %3149 = vmatpush1.bf16.msra.mxu0 %v2723
    %3150 = vmatprep.subr.bf16.mxu0 %v2732
    %3151 = vmatpush1.bf16.msra.mxu0 %v2731
    %3152 = vmatprep.subr.bf16.mxu0 %v2740
    %3153 = vmatpush1.bf16.msra.mxu0 %v2739
    %3154 = vmatprep.subr.bf16.mxu0 %v2748
    %3155 = vmatpush1.bf16.msra.mxu0 %v2747
    %3156 = vmatprep.subr.bf16.mxu0 %v2756
    %3157 = vmatpush1.bf16.msra.mxu0 %v2755
    %3158 = vmatprep.subr.bf16.mxu0 %v2764
    %3159 = vmatpush1.bf16.msra.mxu0 %v2763
    %3160 = vmatprep.subr.bf16.mxu0 %v2772
    %3161 = vmatpush1.bf16.msra.mxu0 %v2771
    %3162 = vmatprep.subr.bf16.mxu0 %v2780
    %3163 = vmatpush1.bf16.msra.mxu0 %v2779
    %3164 = vmatprep.subr.bf16.mxu0 %v2788
    %3165 = vmatpush1.bf16.msra.mxu0 %v2787
    %3166 = vmatprep.subr.bf16.mxu0 %v2796
    %3167 = vmatpush1.bf16.msra.mxu0 %v2795
    %3168 = vmatprep.subr.bf16.mxu0 %v2804
    %3169 = vmatpush1.bf16.msra.mxu0 %v2803
    %3170 = vmatprep.subr.bf16.mxu0 %v2812
    %3171 = vmatpush1.bf16.msra.mxu0 %v2811
    %3172 = vmatprep.subr.bf16.mxu0 %v2820
    %3173 = vmatpush1.bf16.msra.mxu0 %v2819
    %3174 = vmatprep.subr.bf16.mxu0 %v2828
    %3175 = vmatpush1.bf16.msra.mxu0 %v2827
    %3176 = vmatprep.subr.bf16.mxu0 %v2836
    %3177 = vmatpush1.bf16.msra.mxu0 %v2835
    %3178 = vmatprep.subr.bf16.mxu0 %v2844
    %3179 = vmatpush1.bf16.msra.mxu0 %v2843
    %3180 = vmatprep.mubr.bf16.mxu0 %v1528
    %3181 = vmatmul.mubr.bf16.gmra.mrb[0].mxu0 %v1527
    %v3182 = vpop.f32.mrb[0].mxu0
    %v3183 = vadd.f32 %v3142, %v3182
    %v3184 = vpop.f32.mrb[0].mxu0
    %v3185 = vadd.f32 %v3144, %v3184
    %v3186 = vpop.f32.mrb[0].mxu0
    %v3187 = vpop.f32.mrb[0].mxu0
    %3188 = vdwg.mxu0
    %3189 = vmatprep.subr.bf16.mxu0 %v2598
    %3190 = vmatpush1.bf16.msra.mxu0 %v2597
    %3191 = vmatprep.subr.bf16.mxu0 %v2606
    %3192 = vmatpush1.bf16.msra.mxu0 %v2605
    %3193 = vmatprep.subr.bf16.mxu0 %v2614
    %3194 = vmatpush1.bf16.msra.mxu0 %v2613
    %3195 = vmatprep.subr.bf16.mxu0 %v2622
    %3196 = vmatpush1.bf16.msra.mxu0 %v2621
    %3197 = vmatprep.subr.bf16.mxu0 %v2630
    %3198 = vmatpush1.bf16.msra.mxu0 %v2629
    %3199 = vmatprep.subr.bf16.mxu0 %v2638
    %3200 = vmatpush1.bf16.msra.mxu0 %v2637
    %3201 = vmatprep.subr.bf16.mxu0 %v2646
    %3202 = vmatpush1.bf16.msra.mxu0 %v2645
    %3203 = vmatprep.subr.bf16.mxu0 %v2654
    %3204 = vmatpush1.bf16.msra.mxu0 %v2653
    %3205 = vmatprep.subr.bf16.mxu0 %v2662
    %3206 = vmatpush1.bf16.msra.mxu0 %v2661
    %3207 = vmatprep.subr.bf16.mxu0 %v2670
    %3208 = vmatpush1.bf16.msra.mxu0 %v2669
    %3209 = vmatprep.subr.bf16.mxu0 %v2678
    %3210 = vmatpush1.bf16.msra.mxu0 %v2677
    %3211 = vmatprep.subr.bf16.mxu0 %v2686
    %3212 = vmatpush1.bf16.msra.mxu0 %v2685
    %3213 = vmatprep.subr.bf16.mxu0 %v2694
    %3214 = vmatpush1.bf16.msra.mxu0 %v2693
    %3215 = vmatprep.subr.bf16.mxu0 %v2702
    %3216 = vmatpush1.bf16.msra.mxu0 %v2701
    %3217 = vmatprep.subr.bf16.mxu0 %v2710
    %3218 = vmatpush1.bf16.msra.mxu0 %v2709
    %3219 = vmatprep.subr.bf16.mxu0 %v2718
    %3220 = vmatpush1.bf16.msra.mxu0 %v2717
    %3221 = vmatprep.mubr.bf16.mxu0 %v1526
    %3222 = vmatmul.mubr.bf16.gmra.mrb[0].mxu0 %v1525
    %v3223 = vpop.f32.mrb[0].mxu0
    %v3224 = vadd.f32 %v1798, %v3223
    %v3225 = vpop.f32.mrb[0].mxu0
    %v3226 = vadd.f32 %v1802, %v3225
    %v3227 = vpop.f32.mrb[0].mxu0
    %v3228 = vpop.f32.mrb[0].mxu0
    %3229 = vdwg.mxu0
    %3230 = vmatprep.subr.bf16.mxu0 %v2726
    %3231 = vmatpush1.bf16.msra.mxu0 %v2725
    %3232 = vmatprep.subr.bf16.mxu0 %v2734
    %3233 = vmatpush1.bf16.msra.mxu0 %v2733
    %3234 = vmatprep.subr.bf16.mxu0 %v2742
    %3235 = vmatpush1.bf16.msra.mxu0 %v2741
    %3236 = vmatprep.subr.bf16.mxu0 %v2750
    %3237 = vmatpush1.bf16.msra.mxu0 %v2749
    %3238 = vmatprep.subr.bf16.mxu0 %v2758
    %3239 = vmatpush1.bf16.msra.mxu0 %v2757
    %3240 = vmatprep.subr.bf16.mxu0 %v2766
    %3241 = vmatpush1.bf16.msra.mxu0 %v2765
    %3242 = vmatprep.subr.bf16.mxu0 %v2774
    %3243 = vmatpush1.bf16.msra.mxu0 %v2773
    %3244 = vmatprep.subr.bf16.mxu0 %v2782
    %3245 = vmatpush1.bf16.msra.mxu0 %v2781
    %3246 = vmatprep.subr.bf16.mxu0 %v2790
    %3247 = vmatpush1.bf16.msra.mxu0 %v2789
    %3248 = vmatprep.subr.bf16.mxu0 %v2798
    %3249 = vmatpush1.bf16.msra.mxu0 %v2797
    %3250 = vmatprep.subr.bf16.mxu0 %v2806
    %3251 = vmatpush1.bf16.msra.mxu0 %v2805
    %3252 = vmatprep.subr.bf16.mxu0 %v2814
    %3253 = vmatpush1.bf16.msra.mxu0 %v2813
    %3254 = vmatprep.subr.bf16.mxu0 %v2822
    %3255 = vmatpush1.bf16.msra.mxu0 %v2821
    %3256 = vmatprep.subr.bf16.mxu0 %v2830
    %3257 = vmatpush1.bf16.msra.mxu0 %v2829
    %3258 = vmatprep.subr.bf16.mxu0 %v2838
    %3259 = vmatpush1.bf16.msra.mxu0 %v2837
    %3260 = vmatprep.subr.bf16.mxu0 %v2846
    %3261 = vmatpush1.bf16.msra.mxu0 %v2845
    %3262 = vmatprep.mubr.bf16.mxu0 %v1528
    %3263 = vmatmul.mubr.bf16.gmra.mrb[0].mxu0 %v1527
    %v3264 = vpop.f32.mrb[0].mxu0
    %v3265 = vadd.f32 %v3224, %v3264
    %v3266 = vpop.f32.mrb[0].mxu0
    %v3267 = vadd.f32 %v3226, %v3266
    %v3268 = vpop.f32.mrb[0].mxu0
    %v3269 = vpop.f32.mrb[0].mxu0
    %3270 = vdwg.mxu0
    %3271 = vmatprep.subr.bf16.mxu0 %v2600
    %3272 = vmatpush1.bf16.msra.mxu0 %v2599
    %3273 = vmatprep.subr.bf16.mxu0 %v2608
    %3274 = vmatpush1.bf16.msra.mxu0 %v2607
    %3275 = vmatprep.subr.bf16.mxu0 %v2616
    %3276 = vmatpush1.bf16.msra.mxu0 %v2615
    %3277 = vmatprep.subr.bf16.mxu0 %v2624
    %3278 = vmatpush1.bf16.msra.mxu0 %v2623
    %3279 = vmatprep.subr.bf16.mxu0 %v2632
    %3280 = vmatpush1.bf16.msra.mxu0 %v2631
    %3281 = vmatprep.subr.bf16.mxu0 %v2640
    %3282 = vmatpush1.bf16.msra.mxu0 %v2639
    %3283 = vmatprep.subr.bf16.mxu0 %v2648
    %3284 = vmatpush1.bf16.msra.mxu0 %v2647
    %3285 = vmatprep.subr.bf16.mxu0 %v2656
    %3286 = vmatpush1.bf16.msra.mxu0 %v2655
    %3287 = vmatprep.subr.bf16.mxu0 %v2664
    %3288 = vmatpush1.bf16.msra.mxu0 %v2663
    %3289 = vmatprep.subr.bf16.mxu0 %v2672
    %3290 = vmatpush1.bf16.msra.mxu0 %v2671
    %3291 = vmatprep.subr.bf16.mxu0 %v2680
    %3292 = vmatpush1.bf16.msra.mxu0 %v2679
    %3293 = vmatprep.subr.bf16.mxu0 %v2688
    %3294 = vmatpush1.bf16.msra.mxu0 %v2687
    %3295 = vmatprep.subr.bf16.mxu0 %v2696
    %3296 = vmatpush1.bf16.msra.mxu0 %v2695
    %3297 = vmatprep.subr.bf16.mxu0 %v2704
    %3298 = vmatpush1.bf16.msra.mxu0 %v2703
    %3299 = vmatprep.subr.bf16.mxu0 %v2712
    %3300 = vmatpush1.bf16.msra.mxu0 %v2711
    %3301 = vmatprep.subr.bf16.mxu0 %v2720
    %3302 = vmatpush1.bf16.msra.mxu0 %v2719
    %3303 = vmatprep.mubr.bf16.mxu0 %v1526
    %3304 = vmatmul.mubr.bf16.gmra.mrb[0].mxu0 %v1525
    %v3305 = vpop.f32.mrb[0].mxu0
    %v3306 = vadd.f32 %v1806, %v3305
    %v3307 = vpop.f32.mrb[0].mxu0
    %v3308 = vadd.f32 %v1810, %v3307
    %v3309 = vpop.f32.mrb[0].mxu0
    %v3310 = vpop.f32.mrb[0].mxu0
    %3311 = vdwg.mxu0
    %3312 = vmatprep.subr.bf16.mxu0 %v2728
    %3313 = vmatpush1.bf16.msra.mxu0 %v2727
    %3314 = vmatprep.subr.bf16.mxu0 %v2736
    %3315 = vmatpush1.bf16.msra.mxu0 %v2735
    %3316 = vmatprep.subr.bf16.mxu0 %v2744
    %3317 = vmatpush1.bf16.msra.mxu0 %v2743
    %3318 = vmatprep.subr.bf16.mxu0 %v2752
    %3319 = vmatpush1.bf16.msra.mxu0 %v2751
    %3320 = vmatprep.subr.bf16.mxu0 %v2760
    %3321 = vmatpush1.bf16.msra.mxu0 %v2759
    %3322 = vmatprep.subr.bf16.mxu0 %v2768
    %3323 = vmatpush1.bf16.msra.mxu0 %v2767
    %3324 = vmatprep.subr.bf16.mxu0 %v2776
    %3325 = vmatpush1.bf16.msra.mxu0 %v2775
    %3326 = vmatprep.subr.bf16.mxu0 %v2784
    %3327 = vmatpush1.bf16.msra.mxu0 %v2783
    %3328 = vmatprep.subr.bf16.mxu0 %v2792
    %3329 = vmatpush1.bf16.msra.mxu0 %v2791
    %3330 = vmatprep.subr.bf16.mxu0 %v2800
    %3331 = vmatpush1.bf16.msra.mxu0 %v2799
    %3332 = vmatprep.subr.bf16.mxu0 %v2808
    %3333 = vmatpush1.bf16.msra.mxu0 %v2807
    %3334 = vmatprep.subr.bf16.mxu0 %v2816
    %3335 = vmatpush1.bf16.msra.mxu0 %v2815
    %3336 = vmatprep.subr.bf16.mxu0 %v2824
    %3337 = vmatpush1.bf16.msra.mxu0 %v2823
    %3338 = vmatprep.subr.bf16.mxu0 %v2832
    %3339 = vmatpush1.bf16.msra.mxu0 %v2831
    %3340 = vmatprep.subr.bf16.mxu0 %v2840
    %3341 = vmatpush1.bf16.msra.mxu0 %v2839
    %3342 = vmatprep.subr.bf16.mxu0 %v2848
    %3343 = vmatpush1.bf16.msra.mxu0 %v2847
    %3344 = vmatprep.mubr.bf16.mxu0 %v1528
    %3345 = vmatmul.mubr.bf16.gmra.mrb[0].mxu0 %v1527
    %v3346 = vpop.f32.mrb[0].mxu0
    %v3347 = vadd.f32 %v3306, %v3346
    %v3348 = vpop.f32.mrb[0].mxu0
    %v3349 = vadd.f32 %v3308, %v3348
    %v3350 = vpop.f32.mrb[0].mxu0
    %v3351 = vpop.f32.mrb[0].mxu0
    %3352 = vdwg.mxu0
    %3353 = vmatprep.subr.bf16.mxu0 %v2602
    %3354 = vmatpush1.bf16.msra.mxu0 %v2601
    %3355 = vmatprep.subr.bf16.mxu0 %v2610
    %3356 = vmatpush1.bf16.msra.mxu0 %v2609
    %3357 = vmatprep.subr.bf16.mxu0 %v2618
    %3358 = vmatpush1.bf16.msra.mxu0 %v2617
    %3359 = vmatprep.subr.bf16.mxu0 %v2626
    %3360 = vmatpush1.bf16.msra.mxu0 %v2625
    %3361 = vmatprep.subr.bf16.mxu0 %v2634
    %3362 = vmatpush1.bf16.msra.mxu0 %v2633
    %3363 = vmatprep.subr.bf16.mxu0 %v2642
    %3364 = vmatpush1.bf16.msra.mxu0 %v2641
    %3365 = vmatprep.subr.bf16.mxu0 %v2650
    %3366 = vmatpush1.bf16.msra.mxu0 %v2649
    %3367 = vmatprep.subr.bf16.mxu0 %v2658
    %3368 = vmatpush1.bf16.msra.mxu0 %v2657
    %3369 = vmatprep.subr.bf16.mxu0 %v2666
    %3370 = vmatpush1.bf16.msra.mxu0 %v2665
    %3371 = vmatprep.subr.bf16.mxu0 %v2674
    %3372 = vmatpush1.bf16.msra.mxu0 %v2673
    %3373 = vmatprep.subr.bf16.mxu0 %v2682
    %3374 = vmatpush1.bf16.msra.mxu0 %v2681
    %3375 = vmatprep.subr.bf16.mxu0 %v2690
    %3376 = vmatpush1.bf16.msra.mxu0 %v2689
    %3377 = vmatprep.subr.bf16.mxu0 %v2698
    %3378 = vmatpush1.bf16.msra.mxu0 %v2697
    %3379 = vmatprep.subr.bf16.mxu0 %v2706
    %3380 = vmatpush1.bf16.msra.mxu0 %v2705
    %3381 = vmatprep.subr.bf16.mxu0 %v2714
    %3382 = vmatpush1.bf16.msra.mxu0 %v2713
    %3383 = vmatprep.subr.bf16.mxu0 %v2722
    %3384 = vmatpush1.bf16.msra.mxu0 %v2721
    %3385 = vmatprep.mubr.bf16.mxu0 %v1526
    %3386 = vmatmul.mubr.bf16.gmra.mrb[0].mxu0 %v1525
    %v3387 = vpop.f32.mrb[0].mxu0
    %v3388 = vadd.f32 %v1814, %v3387
    %v3389 = vpop.f32.mrb[0].mxu0
    %v3390 = vadd.f32 %v1818, %v3389
    %v3391 = vpop.f32.mrb[0].mxu0
    %v3392 = vpop.f32.mrb[0].mxu0
    %3393 = vdwg.mxu0
    %3394 = vmatprep.subr.bf16.mxu0 %v2730
    %3395 = vmatpush1.bf16.msra.mxu0 %v2729
    %3396 = vmatprep.subr.bf16.mxu0 %v2738
    %3397 = vmatpush1.bf16.msra.mxu0 %v2737
    %3398 = vmatprep.subr.bf16.mxu0 %v2746
    %3399 = vmatpush1.bf16.msra.mxu0 %v2745
    %3400 = vmatprep.subr.bf16.mxu0 %v2754
    %3401 = vmatpush1.bf16.msra.mxu0 %v2753
    %3402 = vmatprep.subr.bf16.mxu0 %v2762
    %3403 = vmatpush1.bf16.msra.mxu0 %v2761
    %3404 = vmatprep.subr.bf16.mxu0 %v2770
    %3405 = vmatpush1.bf16.msra.mxu0 %v2769
    %3406 = vmatprep.subr.bf16.mxu0 %v2778
    %3407 = vmatpush1.bf16.msra.mxu0 %v2777
    %3408 = vmatprep.subr.bf16.mxu0 %v2786
    %3409 = vmatpush1.bf16.msra.mxu0 %v2785
    %3410 = vmatprep.subr.bf16.mxu0 %v2794
    %3411 = vmatpush1.bf16.msra.mxu0 %v2793
    %3412 = vmatprep.subr.bf16.mxu0 %v2802
    %3413 = vmatpush1.bf16.msra.mxu0 %v2801
    %3414 = vmatprep.subr.bf16.mxu0 %v2810
    %3415 = vmatpush1.bf16.msra.mxu0 %v2809
    %3416 = vmatprep.subr.bf16.mxu0 %v2818
    %3417 = vmatpush1.bf16.msra.mxu0 %v2817
    %3418 = vmatprep.subr.bf16.mxu0 %v2826
    %3419 = vmatpush1.bf16.msra.mxu0 %v2825
    %3420 = vmatprep.subr.bf16.mxu0 %v2834
    %3421 = vmatpush1.bf16.msra.mxu0 %v2833
    %3422 = vmatprep.subr.bf16.mxu0 %v2842
    %3423 = vmatpush1.bf16.msra.mxu0 %v2841
    %3424 = vmatprep.subr.bf16.mxu0 %v2850
    %3425 = vmatpush1.bf16.msra.mxu0 %v2849
    %3426 = vmatprep.mubr.bf16.mxu0 %v1528
    %3427 = vmatmul.mubr.bf16.gmra.mrb[0].mxu0 %v1527
    %v3428 = vpop.f32.mrb[0].mxu0
    %v3429 = vadd.f32 %v3388, %v3428
    %v3430 = vpop.f32.mrb[0].mxu0
    %v3431 = vadd.f32 %v3390, %v3430
    %v3432 = vpop.f32.mrb[0].mxu0
    %v3433 = vpop.f32.mrb[0].mxu0
    %3434 = vdwg.mxu0
    %v3443 = vcombine.low %v3183, %v3185
    %v3444 = vcombine.low %v3265, %v3267
    %v3446 = vunpack.c.l.s4 1983009808
    %v3447 = vunpack.c.0.s8 %v3446
    %v3448 = vlaneseq
    %v3449 = vshrl.u32 %v3448, 7
    %v3450 = vsub.s32 %v3447, %v3449
    %v3451 = vrot.slane %v3443, %v3450
    %v3453 = vunpack.c.l.s4 1983009808
    %v3454 = vunpack.c.0.s8 %v3453
    %v3455 = vlaneseq
    %v3456 = vshrl.u32 %v3455, 7
    %v3457 = vsub.s32 %v3454, %v3456
    %v3458 = vrot.slane %v3444, %v3457
    %v3459 = vcombine.low %v3451, %v3458
    %v3460 = vcombine.low %v3347, %v3349
    %v3461 = vcombine.low %v3429, %v3431
    %v3463 = vunpack.c.l.s4 1983009808
    %v3464 = vunpack.c.0.s8 %v3463
    %v3465 = vlaneseq
    %v3466 = vshrl.u32 %v3465, 7
    %v3467 = vsub.s32 %v3464, %v3466
    %v3468 = vrot.slane %v3460, %v3467
    %v3470 = vunpack.c.l.s4 1983009808
    %v3471 = vunpack.c.0.s8 %v3470
    %v3472 = vlaneseq
    %v3473 = vshrl.u32 %v3472, 7
    %v3474 = vsub.s32 %v3471, %v3473
    %v3475 = vrot.slane %v3461, %v3474
    %v3476 = vcombine.low %v3468, %v3475
    %3479 = vst [vmem:[#allocation8] sm:$0xff] %v3459
    %3480 = vst [vmem:[#allocation8 + $0x8] sm:$0xff] %v3476
    // Predicated region
    $region34: #{tpu_custom_call.1} parent=1 // pred_check
      _
    $region35: #{tpu_custom_call.1} parent=1 // pred_check_branch
      %3482 = sbr.rel (0) target = $region37
    $region36: #{tpu_custom_call.1} parent=1 // pred_region
      %s3484 = ssub.s32 256, 256
      %3485 = vsyncadd [#allocation4], %s3484
      %s3487 = sshll.u32 [#allocation8], 4
      %s3488 = int_to_ptr.vmem [resolvable:$true] %s3487
      %3490 = dma.vmem_to_hbm [thread:$0]  %s3488, 256, %s5, [#allocation4]
    $region37: #{tpu_custom_call.1} parent=1 // pred_fallthru
      _
    // Predicated region
    $region38: #{tpu_custom_call.1} parent=1 // pred_check
      _
    $region39: #{tpu_custom_call.1} parent=1 // pred_check_branch
      %3492 = sbr.rel (0) target = $region41
    $region40: #{tpu_custom_call.1} parent=1 // pred_region
      %3493 = dma.done [#allocation4], 256
    $region41: #{tpu_custom_call.1} parent=1 // pred_fallthru
      _
    %3494 = vsyncpa [#allocation3], 1
    %3495 = vsyncpa [#allocation6], 1
    %3496 = vsyncpa [#allocation4], 1

</llo_original>
